<compile_context>
chip_gen: v5e
topology: v5e:2x2
jax: 0.10.0
libtpu: 0.0.40
codegen_flags: <defaults>
</compile_context>

<pallas_src>
import functools

import jax
import jax.numpy as jnp
from jax import lax
from jax.experimental import pallas as pl
from jax.experimental.pallas import tpu as pltpu


def _apply_act(y, act):
    if act is None:
        return y
    if act == "relu":
        return jnp.maximum(y, 0.0)
    if act in ("silu", "swish"):
        return y * jax.nn.sigmoid(y)
    if act == "gelu":
        # approximate=False matches torch.nn.GELU (erf) semantics.
        return jax.nn.gelu(y, approximate=False)
    if act == "leaky_relu":
        return jnp.where(y >= 0, y, 0.01 * y)
    raise ValueError(f"unsupported act: {act}")


# ----------------------------- Pallas kernel --------------------------------
def _conv_bn_act_kernel(x_ref, w_ref, b_ref, o_ref, *, KH, KW, stride, TH, OW,
                        act, fuse_k):
    # x_ref: (1, Hp, Wp, Cin)      zero-padded NHWC image (bf16), resident
    #                              across the cout/row grid axes
    # w_ref: (KH*KW*Cin, TN)       BN-scale-folded conv weight tile (bf16)
    # b_ref: (1, TN)               folded BN bias (f32)
    # o_ref: (1, TH, OW, TN)       output tile, NHWC, lane-dense TN
    cin = x_ref.shape[-1]
    tn = o_ref.shape[-1]

    t = pl.program_id(2)                      # output-row tile index (innermost)
    r0 = t * (TH * stride)
    if (TH * stride) % 8 == 0:
        r0 = pl.multiple_of(r0, 8)

    def tap(i, j):
        # Shifted (TH, OW, Cin) window for kernel tap (i, j).
        if stride == 1:
            rows = pl.ds(r0 + i, TH)
            cols = pl.ds(j, OW)
        else:
            rows = pl.ds(r0 + i, TH, stride)
            cols = pl.ds(j, OW, stride)
        return x_ref[0, rows, cols, :]

    if fuse_k:
        # In-register im2col: single MXU matmul, contraction = KH*KW*Cin.
        patches = jnp.concatenate(
            [tap(i, j) for i in range(KH) for j in range(KW)], axis=-1)
        patches = patches.reshape(TH * OW, KH * KW * cin)
        acc = jnp.dot(patches, w_ref[...], preferred_element_type=jnp.float32)
    else:
        # Accumulate one matmul per tap (Cin already MXU-friendly).
        acc = jnp.zeros((TH * OW, tn), jnp.float32)
        for i in range(KH):
            for j in range(KW):
                xs = tap(i, j).reshape(TH * OW, cin)
                k0 = (i * KW + j) * cin
                wk = w_ref[k0:k0 + cin, :]                  # static slice: view
                acc = acc + jnp.dot(xs, wk, preferred_element_type=jnp.float32)

    y = _apply_act(acc + b_ref[...], act)                   # f32 epilogue
    o_ref[0] = y.reshape(TH, OW, tn).astype(o_ref.dtype)


# ------------------------------- wrapper -------------------------------------
def conv_norm_layer(x, weight, gamma, beta, running_mean, running_var, *,
                    stride, padding=None, eps=1e-5, act=None,
                    compute_dtype=jnp.bfloat16, m_tile_target=512,
                    cout_tile=256):
    """ConvNormLayer forward. x: (N, Cin, H, W) NCHW, weight: (Cout, Cin, KH, KW)."""
    N, Cin, H, W = x.shape
    Cout, Cin_w, KH, KW = weight.shape
    assert Cin == Cin_w
    if padding is None:
        padding = (KH - 1) // 2            # module default

    OH = (H + 2 * padding - KH) // stride + 1
    OW = (W + 2 * padding - KW) // stride + 1
    Hp, Wp = H + 2 * padding, W + 2 * padding
    assert OH >= 1 and OW >= 1

    # ---- fold inference BatchNorm into the conv weight / a per-channel bias ----
    scale = gamma / jnp.sqrt(running_var + eps)          # (Cout,)
    bias = beta - running_mean * scale                   # (Cout,)

    # ---- layouts: NCHW -> padded NHWC bf16; OIHW -> (KH*KW*Cin, Cout_p) bf16 ----
    Cout_p = pl.cdiv(Cout, 128) * 128                    # lane-dense output channels
    x_nhwc = jnp.transpose(x, (0, 2, 3, 1))
    x_p = jnp.pad(x_nhwc, ((0, 0), (padding, padding), (padding, padding), (0, 0)))
    x_p = x_p.astype(compute_dtype)

    w = weight.astype(jnp.float32) * scale[:, None, None, None]
    w = jnp.transpose(w, (2, 3, 1, 0)).reshape(KH * KW * Cin, Cout)
    if Cout_p != Cout:
        w = jnp.pad(w, ((0, 0), (0, Cout_p - Cout)))
    w = w.astype(compute_dtype)

    b = bias.reshape(1, Cout).astype(jnp.float32)
    if Cout_p != Cout:
        b = jnp.pad(b, ((0, 0), (0, Cout_p - Cout)))

    # ---- tiling: TH output rows per step (M tile ~ m_tile_target), TN channels ----
    TH = 1
    for d in range(1, OH + 1):               # largest divisor of OH with TH*OW <= target
        if OH % d == 0 and d * OW <= max(OW, m_tile_target):
            TH = d
    TN = cout_tile if (Cout_p % cout_tile == 0) else 128   # Cout_p is a multiple of 128
    n_rt = OH // TH
    n_ct = Cout_p // TN

    # Fuse all KH*KW taps into one matmul when per-tap contraction (Cin) would
    # badly under-fill the MXU; keep the im2col buffer modest.
    fuse_k = (Cin < 128) and (KH * KW * Cin <= 1024)

    kernel = functools.partial(_conv_bn_act_kernel, KH=KH, KW=KW, stride=stride,
                               TH=TH, OW=OW, act=act, fuse_k=fuse_k)
    out = pl.pallas_call(
        kernel,
        out_shape=jax.ShapeDtypeStruct((N, OH, OW, Cout_p), x.dtype),
        grid=(N, n_ct, n_rt),
        in_specs=[
            pl.BlockSpec((1, Hp, Wp, Cin), lambda n, j, t: (n, 0, 0, 0)),
            pl.BlockSpec((KH * KW * Cin, TN), lambda n, j, t: (0, j)),
            pl.BlockSpec((1, TN), lambda n, j, t: (0, j)),
        ],
        out_specs=pl.BlockSpec((1, TH, OW, TN), lambda n, j, t: (n, t, 0, j)),
        compiler_params=pltpu.CompilerParams(
            dimension_semantics=("parallel", "parallel", "parallel")),
    )(x_p, w, b)

    out = out[..., :Cout]                    # drop Cout lane padding
    return jnp.transpose(out, (0, 3, 1, 2))  # NHWC -> NCHW (module API)


# ---------------------------- references --------------------------------------
def _reference_f32(x, weight, gamma, beta, mean, var, *, stride, padding,
                   eps=1e-5, act=None):
    """Full-f32 PyTorch-semantics reference."""
    y = lax.conv_general_dilated(
        x, weight, window_strides=(stride, stride),
        padding=[(padding, padding), (padding, padding)],
        dimension_numbers=("NCHW", "OIHW", "NCHW"))
    g = gamma.reshape(1, -1, 1, 1)
    b = beta.reshape(1, -1, 1, 1)
    m = mean.reshape(1, -1, 1, 1)
    v = var.reshape(1, -1, 1, 1)
    y = (y - m) / jnp.sqrt(v + eps) * g + b
    return _apply_act(y, act)


def _reference_matched(x, weight, gamma, beta, mean, var, *, stride, padding,
                       eps=1e-5, act=None, compute_dtype=jnp.bfloat16):
    """Reference with the same numerics as the kernel (bf16 folded weight, f32 accum)."""
    scale = gamma / jnp.sqrt(var + eps)
    bias = beta - mean * scale
    w = (weight.astype(jnp.float32) * scale[:, None, None, None]).astype(compute_dtype)
    y = lax.conv_general_dilated(
        x.astype(compute_dtype), w, window_strides=(stride, stride),
        padding=[(padding, padding), (padding, padding)],
        dimension_numbers=("NCHW", "OIHW", "NCHW"),
        preferred_element_type=jnp.float32)
    y = y + bias.reshape(1, -1, 1, 1)
    return _apply_act(y, act)


# ---------------------------------- main --------------------------------------
if __name__ == "__main__":
    # ConvNormLayer(ch_in=4, ch_out=8, kernel_size=3, stride=1) -> padding=(3-1)//2=1
    N, C_IN, H, W = 2, 4, 16, 16
    C_OUT, KS, STRIDE = 8, 3, 1
    PAD = (KS - 1) // 2
    ACT = "silu"

    key = jax.random.PRNGKey(0)
    kx, kw, kg, kb, km, kv = jax.random.split(key, 6)

    x = jax.random.normal(kx, (N, C_IN, H, W), dtype=jnp.float32)
    weight = jax.random.normal(kw, (C_OUT, C_IN, KS, KS), dtype=jnp.float32) * 0.1
    gamma = 1.0 + 0.1 * jax.random.normal(kg, (C_OUT,), dtype=jnp.float32)
    beta = 0.1 * jax.random.normal(kb, (C_OUT,), dtype=jnp.float32)
    running_mean = 0.1 * jax.random.normal(km, (C_OUT,), dtype=jnp.float32)
    running_var = jnp.abs(jax.random.normal(kv, (C_OUT,), dtype=jnp.float32)) + 0.5

    out = conv_norm_layer(x, weight, gamma, beta, running_mean, running_var,
                          stride=STRIDE, padding=PAD, act=ACT)
    out = jax.block_until_ready(out)
    assert out.shape == (N, C_OUT, H, W), out.shape

    # Tight check vs. a reference with identical numerics (bf16 folded weights, f32 accum).
    ref_m = _reference_matched(x, weight, gamma, beta, running_mean, running_var,
                               stride=STRIDE, padding=PAD, act=ACT)
    err_m = float(jnp.max(jnp.abs(out - ref_m)))
    assert jnp.allclose(out, ref_m, rtol=5e-3, atol=5e-3), err_m

    # Loose sanity check vs. the full-f32 module semantics (bf16 quantization bound).
    ref = _reference_f32(x, weight, gamma, beta, running_mean, running_var,
                         stride=STRIDE, padding=PAD, act=ACT)
    err = float(jnp.max(jnp.abs(out - ref)))
    assert jnp.allclose(out, ref, rtol=5e-2, atol=5e-2), err

    print("KERNEL_OK")
</pallas_src>

<mosaic_0001>
module attributes {stable_mosaic.version = 11 : i64} {
  func.func @_conv_bn_act_kernel(%arg0: i32, %arg1: i32, %arg2: i32, %arg3: memref<1x18x18x4xbf16, #tpu.memory_space<vmem>>, %arg4: memref<36x128xbf16, #tpu.memory_space<vmem>>, %arg5: memref<1x128xf32, #tpu.memory_space<vmem>>, %arg6: memref<1x16x16x128xf32, #tpu.memory_space<vmem>>) attributes {dimension_semantics = [#tpu.dimension_semantics<parallel>, #tpu.dimension_semantics<parallel>, #tpu.dimension_semantics<parallel>], iteration_bounds = array<i64: 2, 1, 1>, scalar_prefetch = 0 : i64, scratch_operands = 0 : i64, tpu.core_type = #tpu.core_type<tc>, window_params = [{transform_indices = @transform_0, window_bounds = array<i64: 1, 18, 18, 4>}, {transform_indices = @transform_1, window_bounds = array<i64: 36, 128>}, {transform_indices = @transform_2, window_bounds = array<i64: 1, 128>}, {transform_indices = @transform_3, window_bounds = array<i64: 1, 16, 16, 128>}]} {
    %c16_i32 = arith.constant 16 : i32
    %0 = arith.muli %arg2, %c16_i32 : i32
    %1 = tpu.assume_multiple %0, 8 : i32
    %c0_i32 = arith.constant 0 : i32
    %2 = arith.addi %1, %c0_i32 : i32
    %c0 = arith.constant 0 : index
    %3 = arith.index_cast %2 : i32 to index
    %c0_0 = arith.constant 0 : index
    %c0_1 = arith.constant 0 : index
    %4 = vector.load %arg3[%c0, %3, %c0_0, %c0_1] : memref<1x18x18x4xbf16, #tpu.memory_space<vmem>>, vector<1x16x16x4xbf16>
    %5 = vector.shape_cast %4 : vector<1x16x16x4xbf16> to vector<16x16x4xbf16>
    %c0_i32_2 = arith.constant 0 : i32
    %6 = arith.addi %1, %c0_i32_2 : i32
    %c0_3 = arith.constant 0 : index
    %7 = arith.index_cast %6 : i32 to index
    %c1 = arith.constant 1 : index
    %c0_4 = arith.constant 0 : index
    %8 = vector.load %arg3[%c0_3, %7, %c1, %c0_4] : memref<1x18x18x4xbf16, #tpu.memory_space<vmem>>, vector<1x16x16x4xbf16>
    %9 = vector.shape_cast %8 : vector<1x16x16x4xbf16> to vector<16x16x4xbf16>
    %c0_i32_5 = arith.constant 0 : i32
    %10 = arith.addi %1, %c0_i32_5 : i32
    %c0_6 = arith.constant 0 : index
    %11 = arith.index_cast %10 : i32 to index
    %c2 = arith.constant 2 : index
    %c0_7 = arith.constant 0 : index
    %12 = vector.load %arg3[%c0_6, %11, %c2, %c0_7] : memref<1x18x18x4xbf16, #tpu.memory_space<vmem>>, vector<1x16x16x4xbf16>
    %13 = vector.shape_cast %12 : vector<1x16x16x4xbf16> to vector<16x16x4xbf16>
    %c1_i32 = arith.constant 1 : i32
    %14 = arith.addi %1, %c1_i32 : i32
    %c0_8 = arith.constant 0 : index
    %15 = arith.index_cast %14 : i32 to index
    %c0_9 = arith.constant 0 : index
    %c0_10 = arith.constant 0 : index
    %16 = vector.load %arg3[%c0_8, %15, %c0_9, %c0_10] : memref<1x18x18x4xbf16, #tpu.memory_space<vmem>>, vector<1x16x16x4xbf16>
    %17 = vector.shape_cast %16 : vector<1x16x16x4xbf16> to vector<16x16x4xbf16>
    %c1_i32_11 = arith.constant 1 : i32
    %18 = arith.addi %1, %c1_i32_11 : i32
    %c0_12 = arith.constant 0 : index
    %19 = arith.index_cast %18 : i32 to index
    %c1_13 = arith.constant 1 : index
    %c0_14 = arith.constant 0 : index
    %20 = vector.load %arg3[%c0_12, %19, %c1_13, %c0_14] : memref<1x18x18x4xbf16, #tpu.memory_space<vmem>>, vector<1x16x16x4xbf16>
    %21 = vector.shape_cast %20 : vector<1x16x16x4xbf16> to vector<16x16x4xbf16>
    %c1_i32_15 = arith.constant 1 : i32
    %22 = arith.addi %1, %c1_i32_15 : i32
    %c0_16 = arith.constant 0 : index
    %23 = arith.index_cast %22 : i32 to index
    %c2_17 = arith.constant 2 : index
    %c0_18 = arith.constant 0 : index
    %24 = vector.load %arg3[%c0_16, %23, %c2_17, %c0_18] : memref<1x18x18x4xbf16, #tpu.memory_space<vmem>>, vector<1x16x16x4xbf16>
    %25 = vector.shape_cast %24 : vector<1x16x16x4xbf16> to vector<16x16x4xbf16>
    %c2_i32 = arith.constant 2 : i32
    %26 = arith.addi %1, %c2_i32 : i32
    %c0_19 = arith.constant 0 : index
    %27 = arith.index_cast %26 : i32 to index
    %c0_20 = arith.constant 0 : index
    %c0_21 = arith.constant 0 : index
    %28 = vector.load %arg3[%c0_19, %27, %c0_20, %c0_21] : memref<1x18x18x4xbf16, #tpu.memory_space<vmem>>, vector<1x16x16x4xbf16>
    %29 = vector.shape_cast %28 : vector<1x16x16x4xbf16> to vector<16x16x4xbf16>
    %c2_i32_22 = arith.constant 2 : i32
    %30 = arith.addi %1, %c2_i32_22 : i32
    %c0_23 = arith.constant 0 : index
    %31 = arith.index_cast %30 : i32 to index
    %c1_24 = arith.constant 1 : index
    %c0_25 = arith.constant 0 : index
    %32 = vector.load %arg3[%c0_23, %31, %c1_24, %c0_25] : memref<1x18x18x4xbf16, #tpu.memory_space<vmem>>, vector<1x16x16x4xbf16>
    %33 = vector.shape_cast %32 : vector<1x16x16x4xbf16> to vector<16x16x4xbf16>
    %c2_i32_26 = arith.constant 2 : i32
    %34 = arith.addi %1, %c2_i32_26 : i32
    %c0_27 = arith.constant 0 : index
    %35 = arith.index_cast %34 : i32 to index
    %c2_28 = arith.constant 2 : index
    %c0_29 = arith.constant 0 : index
    %36 = vector.load %arg3[%c0_27, %35, %c2_28, %c0_29] : memref<1x18x18x4xbf16, #tpu.memory_space<vmem>>, vector<1x16x16x4xbf16>
    %37 = vector.shape_cast %36 : vector<1x16x16x4xbf16> to vector<16x16x4xbf16>
    %38 = tpu.concatenate %5, %9, %13, %17, %21, %25, %29, %33, %37 in 2 : vector<16x16x4xbf16>, vector<16x16x4xbf16>, vector<16x16x4xbf16>, vector<16x16x4xbf16>, vector<16x16x4xbf16>, vector<16x16x4xbf16>, vector<16x16x4xbf16>, vector<16x16x4xbf16>, vector<16x16x4xbf16> -> vector<16x16x36xbf16>
    %39 = vector.shape_cast %38 : vector<16x16x36xbf16> to vector<256x36xbf16>
    %c0_30 = arith.constant 0 : index
    %c0_31 = arith.constant 0 : index
    %40 = vector.load %arg4[%c0_30, %c0_31] : memref<36x128xbf16, #tpu.memory_space<vmem>>, vector<36x128xbf16>
    %cst = arith.constant dense<0.000000e+00> : vector<256x128xf32>
    %41 = tpu.matmul %39, %40, %cst {dimension_numbers = #tpu.dot_dimension_numbers<[1], [0], [0], [1], [0, 0, 1, 1], [], []>} : vector<256x36xbf16>, vector<36x128xbf16>, vector<256x128xf32> -> vector<256x128xf32>
    %c0_32 = arith.constant 0 : index
    %c0_33 = arith.constant 0 : index
    %42 = vector.load %arg5[%c0_32, %c0_33] : memref<1x128xf32, #tpu.memory_space<vmem>>, vector<1x128xf32>
    %43 = vector.broadcast %42 : vector<1x128xf32> to vector<256x128xf32>
    %44 = arith.addf %41, %43 : vector<256x128xf32>
    %45 = arith.negf %44 : vector<256x128xf32>
    %46 = math.exp %45 : vector<256x128xf32>
    %cst_34 = arith.constant 1.000000e+00 : f32
    %47 = vector.broadcast %cst_34 : f32 to vector<256x128xf32>
    %48 = arith.addf %47, %46 : vector<256x128xf32>
    %49 = arith.divf %47, %48 : vector<256x128xf32>
    %50 = arith.mulf %44, %49 : vector<256x128xf32>
    %51 = vector.shape_cast %50 : vector<256x128xf32> to vector<16x16x128xf32>
    %c0_35 = arith.constant 0 : index
    %c0_36 = arith.constant 0 : index
    %c0_37 = arith.constant 0 : index
    %c0_38 = arith.constant 0 : index
    %52 = vector.load %arg6[%c0_35, %c0_36, %c0_37, %c0_38] : memref<1x16x16x128xf32, #tpu.memory_space<vmem>>, vector<1x16x16x128xf32>
    %53 = vector.shape_cast %52 : vector<1x16x16x128xf32> to vector<16x16x128xf32>
    %54 = vector.shape_cast %51 : vector<16x16x128xf32> to vector<1x16x16x128xf32>
    tpu.vector_store %arg6[%c0_35, %c0_36, %c0_37, %c0_38], %54 {strides = array<i32>} : memref<1x16x16x128xf32, #tpu.memory_space<vmem>>, vector<1x16x16x128xf32>,
    return
  }
  func.func @transform_0(%arg0: i32, %arg1: i32, %arg2: i32) -> (i32, i32, i32, i32) {
    %c0_i32 = arith.constant 0 : i32
    %c0_i32_0 = arith.constant 0 : i32
    %c0_i32_1 = arith.constant 0 : i32
    %c0_i32_2 = arith.constant 0 : i32
    return %arg0, %c0_i32, %c0_i32_0, %c0_i32_1 : i32, i32, i32, i32
  }
  func.func @transform_1(%arg0: i32, %arg1: i32, %arg2: i32) -> (i32, i32) {
    %c0_i32 = arith.constant 0 : i32
    %c0_i32_0 = arith.constant 0 : i32
    return %c0_i32, %arg1 : i32, i32
  }
  func.func @transform_2(%arg0: i32, %arg1: i32, %arg2: i32) -> (i32, i32) {
    %c0_i32 = arith.constant 0 : i32
    %c0_i32_0 = arith.constant 0 : i32
    return %c0_i32, %arg1 : i32, i32
  }
  func.func @transform_3(%arg0: i32, %arg1: i32, %arg2: i32) -> (i32, i32, i32, i32) {
    %c0_i32 = arith.constant 0 : i32
    %c0_i32_0 = arith.constant 0 : i32
    return %arg0, %arg2, %c0_i32, %arg1 : i32, i32, i32, i32
  }
}

</mosaic_0001>

<llo_original>
// kernel: tpu_custom_call.1
$region0: #{tpu_custom_call.1}
  #allocation0 [shape = 'u32[]', space=smem, size = 0x4, offset = 0x4, fixed_abs, tag = 'smem constant byte address 0x4 - core index']
  #allocation1 [shape = 'u32[72,128]{1,0:T(1,128)}', space=vmem, size = 0x9000, scoped, tag = 'internal scratch']
  %s0 = inlined_call_operand.vmem [shape: bf16[2,18,18,4], index: 0, kind: input, shape index: {}]
  %s1 = inlined_call_operand.vmem [shape: bf16[36,128], index: 1, kind: input, shape index: {}]
  %s2 = inlined_call_operand.vmem [shape: f32[1,128], index: 2, kind: input, shape index: {}]
  %s3 = inlined_call_operand.hbm [shape: f32[2,16,16,128], index: 3, kind: output, shape index: {}]
  %s4 = sld [smem:[#allocation0]]
  $region45: #{tpu_custom_call.1} parent=0
    _
  %s6 = ssub.s32 1, %s4
  %s7 = scalar_select 0, %s6, %s4
  $region1: #{tpu_custom_call.1} parent=0
    #allocation2 [shape = 'u8[262144]{0}', space=vmem, size = 0x40000, scoped, tag = 'output window, operand 0']
    #allocation3 [shape = 's32[2]{0}', space=sflag, size = 0x8, scoped, tag = 'scoped memory for tpu_custom_call.1']
    %8 = vsyncpa [#allocation3], 0
    %s9 = scalar_lea.sflag [#allocation3], 1
    %10 = vsyncpa %s9, 0
    loop: start=0, step=1, limit=4
    $region2: #{tpu_custom_call.1} parent=1 // loop_pre_header
      _
    $region3: #{tpu_custom_call.1} parent=1 // loop_header
      %s12 = sphi 0, %s16
      %p13 = scmp.ge.s32.totalorder %s12, 4
      %s19 = sphi 0, %s38
      %s20 = sphi 0, %s34
      %s21 = sphi 0, %s30
      %s22 = sphi 0, %s19
      %s23 = sphi 0, %s20
      %s24 = sphi 0, %s21
      %s25 = sphi 0, %s22
      %s26 = sphi 0, %s23
      %s27 = sphi 0, %s24
      %s41 = sphi 0, %s43
      %s44 = sphi 0, %s41
      %s45 = sphi 0, %s44
      %s61 = sphi 0, %s45
      %s67 = sphi 0, %s69
      %s70 = sphi 0, %s67
      %s71 = sphi 0, %s70
      %s87 = sphi 0, %s71
      %s93 = sphi 0, %s95
      %s96 = sphi 0, %s93
      %s97 = sphi 0, %s96
      %s113 = sphi 0, %s97
      %s123 = sphi 0, %s125
      %s126 = sphi 0, %s123
      %s127 = sphi 0, %s126
      %s143 = sphi 0, %s127
    $region4: #{tpu_custom_call.1} parent=1 // loop_header_branch
      %15 = sbr.rel (%p13) target = $region8
    $region5: #{tpu_custom_call.1} parent=1 // loop_body
      %s17 = ssub.s32 %s12, 1
      %s18 = ssub.s32 %s12, 2
      %s28 = sadd.s32 1, %s21
      %p29 = scmp.ge.s32.totalorder %s28, 1
      %s30 = scalar_select %p29, 0, %s28
      %s31 = sadd.s32 1, %s20
      %s32 = scalar_select %p29, %s31, %s20
      %p33 = scmp.ge.s32.totalorder %s32, 1
      %s34 = scalar_select %p33, 0, %s32
      %s35 = sadd.s32 1, %s19
      %s36 = scalar_select %p33, %s35, %s19
      %p37 = scmp.ge.s32.totalorder %s36, 2
      %s38 = scalar_select %p37, 0, %s36
      %s39 = ssub.s32 %s19, %s38
      %p40 = scmp.eq.s32.totalorder %s39, 0
      %s42 = sadd.s32 %s41, 1
      %s43 = scalar_select %p40, %s41, %s42
      %p46 = pneg %p40
      %p47 = scmp.eq.s32.totalorder %s12, 1
      %p48 = por %p46, %p47
      %p49 = scmp.ne.s32.totalorder %s41, %s44
      %p50 = scmp.eq.s32.totalorder %s12, 0
      %p51 = por %p49, %p50
      %p52 = scmp.ne.s32.totalorder %s41, %s44
      %p53 = scmp.eq.s32.totalorder %s17, 1
      %p54 = por %p52, %p53
      %p55 = scmp.ne.s32.totalorder %s44, %s45
      %p56 = scmp.eq.s32.totalorder %s17, 0
      %p57 = por %p55, %p56
      %p58 = scmp.ne.s32.totalorder %s44, %s45
      %p59 = scmp.eq.s32.totalorder %s18, 1
      %p60 = por %p58, %p59
      %p62 = scmp.ne.s32.totalorder %s45, %s61
      %p63 = scmp.eq.s32.totalorder %s18, 0
      %p64 = por %p62, %p63
      %s65 = ssub.s32 %s20, %s34
      %p66 = scmp.eq.s32.totalorder %s65, 0
      %s68 = sadd.s32 %s67, 1
      %s69 = scalar_select %p66, %s67, %s68
      %p72 = pneg %p66
      %p73 = scmp.eq.s32.totalorder %s12, 1
      %p74 = por %p72, %p73
      %p75 = scmp.ne.s32.totalorder %s67, %s70
      %p76 = scmp.eq.s32.totalorder %s12, 0
      %p77 = por %p75, %p76
      %p78 = scmp.ne.s32.totalorder %s67, %s70
      %p79 = scmp.eq.s32.totalorder %s17, 1
      %p80 = por %p78, %p79
      %p81 = scmp.ne.s32.totalorder %s70, %s71
      %p82 = scmp.eq.s32.totalorder %s17, 0
      %p83 = por %p81, %p82
      %p84 = scmp.ne.s32.totalorder %s70, %s71
      %p85 = scmp.eq.s32.totalorder %s18, 1
      %p86 = por %p84, %p85
      %p88 = scmp.ne.s32.totalorder %s71, %s87
      %p89 = scmp.eq.s32.totalorder %s18, 0
      %p90 = por %p88, %p89
      %s91 = ssub.s32 %s20, %s34
      %p92 = scmp.eq.s32.totalorder %s91, 0
      %s94 = sadd.s32 %s93, 1
      %s95 = scalar_select %p92, %s93, %s94
      %p98 = pneg %p92
      %p99 = scmp.eq.s32.totalorder %s12, 1
      %p100 = por %p98, %p99
      %p101 = scmp.ne.s32.totalorder %s93, %s96
      %p102 = scmp.eq.s32.totalorder %s12, 0
      %p103 = por %p101, %p102
      %p104 = scmp.ne.s32.totalorder %s93, %s96
      %p105 = scmp.eq.s32.totalorder %s17, 1
      %p106 = por %p104, %p105
      %p107 = scmp.ne.s32.totalorder %s96, %s97
      %p108 = scmp.eq.s32.totalorder %s17, 0
      %p109 = por %p107, %p108
      %p110 = scmp.ne.s32.totalorder %s96, %s97
      %p111 = scmp.eq.s32.totalorder %s18, 1
      %p112 = por %p110, %p111
      %p114 = scmp.ne.s32.totalorder %s97, %s113
      %p115 = scmp.eq.s32.totalorder %s18, 0
      %p116 = por %p114, %p115
      %s117 = ssub.s32 %s19, %s38
      %s118 = ssub.s32 %s21, %s30
      %s119 = sor.u32 %s117, %s118
      %s120 = ssub.s32 %s20, %s34
      %s121 = sor.u32 %s119, %s120
      %p122 = scmp.eq.s32.totalorder %s121, 0
      %s124 = sadd.s32 %s123, 1
      %s125 = scalar_select %p122, %s123, %s124
      %p128 = pneg %p122
      %p129 = scmp.eq.s32.totalorder %s12, 1
      %p130 = por %p128, %p129
      %p131 = scmp.ne.s32.totalorder %s123, %s126
      %p132 = scmp.eq.s32.totalorder %s12, 0
      %p133 = por %p131, %p132
      %p134 = scmp.ne.s32.totalorder %s123, %s126
      %p135 = scmp.eq.s32.totalorder %s17, 1
      %p136 = por %p134, %p135
      %p137 = scmp.ne.s32.totalorder %s126, %s127
      %p138 = scmp.eq.s32.totalorder %s17, 0
      %p139 = por %p137, %p138
      %p140 = scmp.ne.s32.totalorder %s126, %s127
      %p141 = scmp.eq.s32.totalorder %s18, 1
      %p142 = por %p140, %p141
      %p144 = scmp.ne.s32.totalorder %s127, %s143
      %p145 = scmp.eq.s32.totalorder %s18, 0
      %p146 = por %p144, %p145
      %p147 = scmp.le.s32.totalorder 1, %s12
      %p148 = scmp.lt.s32.totalorder %s12, 3
      %p149 = pnand %p147, %p148
      %p150 = pneg %p149
      // Predicated region
      $region9: #{tpu_custom_call.1} parent=5 // pred_check
        _
      $region10: #{tpu_custom_call.1} parent=5 // pred_check_branch
        %152 = sbr.rel (%p149) target = $region12
      $region11: #{tpu_custom_call.1} parent=5 // pred_region
        %s153 = ssub.s32 %s12, 1
        // Predicated region
        $region13: #{tpu_custom_call.1} parent=11 // pred_check
          %p154 = pneg %p83
        $region14: #{tpu_custom_call.1} parent=11 // pred_check_branch
          %156 = sbr.rel (%p154) target = $region16
        $region15: #{tpu_custom_call.1} parent=11 // pred_region
          %p157 = scmp.lt.s32.totalorder %s23, 0
          %s158 = scalar_select %p157, %s23, 0
          %s159 = smul.addr %s158, 4
          %s160 = scalar_lea.vmem %s1, %s159
        $region16: #{tpu_custom_call.1} parent=11 // pred_fallthru
          _
        // Predicated region
        $region17: #{tpu_custom_call.1} parent=11 // pred_check
          %p161 = pneg %p109
        $region18: #{tpu_custom_call.1} parent=11 // pred_check_branch
          %163 = sbr.rel (%p161) target = $region20
        $region19: #{tpu_custom_call.1} parent=11 // pred_region
          %p164 = scmp.lt.s32.totalorder %s23, 0
          %s165 = scalar_select %p164, %s23, 0
          %s166 = scalar_lea.vmem %s2, %s165
        $region20: #{tpu_custom_call.1} parent=11 // pred_fallthru
          _
      $region12: #{tpu_custom_call.1} parent=5 // pred_fallthru
        _
      %p167 = scmp.lt.s32.totalorder %s12, 2
      // Predicated region
      $region21: #{tpu_custom_call.1} parent=5 // pred_check
        %p168 = pneg %p167
      $region22: #{tpu_custom_call.1} parent=5 // pred_check_branch
        %170 = sbr.rel (%p168) target = $region24
      $region23: #{tpu_custom_call.1} parent=5 // pred_region
        // Predicated region
        $region25: #{tpu_custom_call.1} parent=23 // pred_check
          %p171 = pneg %p51
        $region26: #{tpu_custom_call.1} parent=23 // pred_check_branch
          %173 = sbr.rel (%p171) target = $region28
        $region27: #{tpu_custom_call.1} parent=23 // pred_region
          %p174 = scmp.lt.s32.totalorder %s19, 1
          %s175 = scalar_select %p174, %s19, 1
          %s176 = smul.addr %s175, 54
          %s177 = smul.addr %s176, 4
          %s178 = scalar_lea.vmem %s0, %s177
        $region28: #{tpu_custom_call.1} parent=23 // pred_fallthru
          _
      $region24: #{tpu_custom_call.1} parent=5 // pred_fallthru
        _
      %p179 = scmp.le.s32.totalorder 1, %s12
      %p180 = scmp.lt.s32.totalorder %s12, 3
      %p181 = pnand %p179, %p180
      %p182 = pneg %p181
      // Predicated region
      $region29: #{tpu_custom_call.1} parent=5 // pred_check
        _
      $region30: #{tpu_custom_call.1} parent=5 // pred_check_branch
        %184 = sbr.rel (%p181) target = $region32
      $region31: #{tpu_custom_call.1} parent=5 // pred_region
        %s185 = ssub.s32 %s12, 1
        %p186 = scmp.lt.s32.totalorder %s22, 1
        %s187 = scalar_select %p186, %s22, 1
        %s188 = smul.addr %s187, 54
        %s189 = smul.addr %s188, 4
        %s190 = scalar_lea.vmem %s0, %s189
        %p191 = pneg %p57
        %p192 = pneg %p54
        %p193 = scmp.lt.s32.totalorder %s23, 0
        %s194 = scalar_select %p193, %s23, 0
        %s195 = smul.addr %s194, 4
        %s196 = scalar_lea.vmem %s1, %s195
        %p197 = pneg %p83
        %p198 = pneg %p80
        %p199 = scmp.lt.s32.totalorder %s23, 0
        %s200 = scalar_select %p199, %s23, 0
        %s201 = scalar_lea.vmem %s2, %s200
        %p202 = pneg %p109
        %p203 = pneg %p106
        %p204 = pneg %p139
        %p205 = pneg %p136
        %s206 = sand.u32 %s126, 1
        %s207 = scalar_lea.sflag [#allocation3], %s206
        %s208 = sand.u32 %s126, 1
        %s209 = smul.addr %s208, 256
        %s210 = scalar_lea.vmem [#allocation2], %s209
        %p211 = scmp.lt.s32.totalorder %s22, 1
        %s212 = scalar_select %p211, %s22, 1
        %s213 = smul.addr %s212, 54
        %s214 = smul.addr %s213, 4
        %s215 = scalar_lea.vmem %s0, %s214
        %p216 = scmp.lt.s32.totalorder %s23, 0
        %s217 = scalar_select %p216, %s23, 0
        %s218 = smul.addr %s217, 4
        %s219 = scalar_lea.vmem %s1, %s218
        %p220 = scmp.lt.s32.totalorder %s23, 0
        %s221 = scalar_select %p220, %s23, 0
        %s222 = scalar_lea.vmem %s2, %s221
        %s223 = smul.u32 16, %s24
        %s225 = smul.u32 %s24, 16
        %s226 = smul.u32 %s225, 3
        %s227 = smul.addr %s226, 4
        %s228 = scalar_lea.vmem %s215, %s227
        %v229 = vld [vmem:[%s228] sm:$0xf]
        %v230 = vld [vmem:[%s228 + $0x4] sm:$0xf]
        %v231 = vld [vmem:[%s228 + $0xc] sm:$0xf]
        %v232 = vld [vmem:[%s228 + $0x10] sm:$0xf]
        %v233 = vld [vmem:[%s228 + $0x18] sm:$0xf]
        %v234 = vld [vmem:[%s228 + $0x1c] sm:$0xf]
        %v235 = vld [vmem:[%s228 + $0x24] sm:$0xf]
        %v236 = vld [vmem:[%s228 + $0x28] sm:$0xf]
        %v237 = vld [vmem:[%s228 + $0x30] sm:$0xf]
        %v238 = vld [vmem:[%s228 + $0x34] sm:$0xf]
        %v239 = vld [vmem:[%s228 + $0x3c] sm:$0xf]
        %v240 = vld [vmem:[%s228 + $0x40] sm:$0xf]
        %v241 = vld [vmem:[%s228 + $0x48] sm:$0xf]
        %v242 = vld [vmem:[%s228 + $0x4c] sm:$0xf]
        %v243 = vld [vmem:[%s228 + $0x54] sm:$0xf]
        %v244 = vld [vmem:[%s228 + $0x58] sm:$0xf]
        %v245 = vld [vmem:[%s228 + $0x60] sm:$0xf]
        %v246 = vld [vmem:[%s228 + $0x64] sm:$0xf]
        %v247 = vld [vmem:[%s228 + $0x6c] sm:$0xf]
        %v248 = vld [vmem:[%s228 + $0x70] sm:$0xf]
        %v249 = vld [vmem:[%s228 + $0x78] sm:$0xf]
        %v250 = vld [vmem:[%s228 + $0x7c] sm:$0xf]
        %v251 = vld [vmem:[%s228 + $0x84] sm:$0xf]
        %v252 = vld [vmem:[%s228 + $0x88] sm:$0xf]
        %v253 = vld [vmem:[%s228 + $0x90] sm:$0xf]
        %v254 = vld [vmem:[%s228 + $0x94] sm:$0xf]
        %v255 = vld [vmem:[%s228 + $0x9c] sm:$0xf]
        %v256 = vld [vmem:[%s228 + $0xa0] sm:$0xf]
        %v257 = vld [vmem:[%s228 + $0xa8] sm:$0xf]
        %v258 = vld [vmem:[%s228 + $0xac] sm:$0xf]
        %v259 = vld [vmem:[%s228 + $0xb4] sm:$0xf]
        %v260 = vld [vmem:[%s228 + $0xb8] sm:$0xf]
        %v261 = vld [vmem:[%s228 + $0x8] sm:$0x1]
        %v262 = vld [vmem:[%s228 + $0x14] sm:$0x1]
        %v263 = vld [vmem:[%s228 + $0x20] sm:$0x1]
        %v264 = vld [vmem:[%s228 + $0x2c] sm:$0x1]
        %v265 = vld [vmem:[%s228 + $0x38] sm:$0x1]
        %v266 = vld [vmem:[%s228 + $0x44] sm:$0x1]
        %v267 = vld [vmem:[%s228 + $0x50] sm:$0x1]
        %v268 = vld [vmem:[%s228 + $0x5c] sm:$0x1]
        %v269 = vld [vmem:[%s228 + $0x68] sm:$0x1]
        %v270 = vld [vmem:[%s228 + $0x74] sm:$0x1]
        %v271 = vld [vmem:[%s228 + $0x80] sm:$0x1]
        %v272 = vld [vmem:[%s228 + $0x8c] sm:$0x1]
        %v273 = vld [vmem:[%s228 + $0x98] sm:$0x1]
        %v274 = vld [vmem:[%s228 + $0xa4] sm:$0x1]
        %v275 = vld [vmem:[%s228 + $0xb0] sm:$0x1]
        %v276 = vld [vmem:[%s228 + $0xbc] sm:$0x1]
        %v277 = vld [vmem:[%s228] sm:$0xe]
        %v278 = vld [vmem:[%s228 + $0xc] sm:$0xe]
        %v279 = vld [vmem:[%s228 + $0x18] sm:$0xe]
        %v280 = vld [vmem:[%s228 + $0x24] sm:$0xe]
        %v281 = vld [vmem:[%s228 + $0x30] sm:$0xe]
        %v282 = vld [vmem:[%s228 + $0x3c] sm:$0xe]
        %v283 = vld [vmem:[%s228 + $0x48] sm:$0xe]
        %v284 = vld [vmem:[%s228 + $0x54] sm:$0xe]
        %v285 = vld [vmem:[%s228 + $0x60] sm:$0xe]
        %v286 = vld [vmem:[%s228 + $0x6c] sm:$0xe]
        %v287 = vld [vmem:[%s228 + $0x78] sm:$0xe]
        %v288 = vld [vmem:[%s228 + $0x84] sm:$0xe]
        %v289 = vld [vmem:[%s228 + $0x90] sm:$0xe]
        %v290 = vld [vmem:[%s228 + $0x9c] sm:$0xe]
        %v291 = vld [vmem:[%s228 + $0xa8] sm:$0xe]
        %v292 = vld [vmem:[%s228 + $0xb4] sm:$0xe]
        %s293 = sadd.s32 %s225, 1
        %s294 = smul.u32 %s293, 3
        %s295 = smul.addr %s294, 4
        %s296 = scalar_lea.vmem %s215, %s295
        %v297 = vld [vmem:[%s296] sm:$0xf]
        %v298 = vld [vmem:[%s296 + $0x4] sm:$0xf]
        %v299 = vld [vmem:[%s296 + $0xc] sm:$0xf]
        %v300 = vld [vmem:[%s296 + $0x10] sm:$0xf]
        %v301 = vld [vmem:[%s296 + $0x18] sm:$0xf]
        %v302 = vld [vmem:[%s296 + $0x1c] sm:$0xf]
        %v303 = vld [vmem:[%s296 + $0x24] sm:$0xf]
        %v304 = vld [vmem:[%s296 + $0x28] sm:$0xf]
        %v305 = vld [vmem:[%s296 + $0x30] sm:$0xf]
        %v306 = vld [vmem:[%s296 + $0x34] sm:$0xf]
        %v307 = vld [vmem:[%s296 + $0x3c] sm:$0xf]
        %v308 = vld [vmem:[%s296 + $0x40] sm:$0xf]
        %v309 = vld [vmem:[%s296 + $0x48] sm:$0xf]
        %v310 = vld [vmem:[%s296 + $0x4c] sm:$0xf]
        %v311 = vld [vmem:[%s296 + $0x54] sm:$0xf]
        %v312 = vld [vmem:[%s296 + $0x58] sm:$0xf]
        %v313 = vld [vmem:[%s296 + $0x60] sm:$0xf]
        %v314 = vld [vmem:[%s296 + $0x64] sm:$0xf]
        %v315 = vld [vmem:[%s296 + $0x6c] sm:$0xf]
        %v316 = vld [vmem:[%s296 + $0x70] sm:$0xf]
        %v317 = vld [vmem:[%s296 + $0x78] sm:$0xf]
        %v318 = vld [vmem:[%s296 + $0x7c] sm:$0xf]
        %v319 = vld [vmem:[%s296 + $0x84] sm:$0xf]
        %v320 = vld [vmem:[%s296 + $0x88] sm:$0xf]
        %v321 = vld [vmem:[%s296 + $0x90] sm:$0xf]
        %v322 = vld [vmem:[%s296 + $0x94] sm:$0xf]
        %v323 = vld [vmem:[%s296 + $0x9c] sm:$0xf]
        %v324 = vld [vmem:[%s296 + $0xa0] sm:$0xf]
        %v325 = vld [vmem:[%s296 + $0xa8] sm:$0xf]
        %v326 = vld [vmem:[%s296 + $0xac] sm:$0xf]
        %v327 = vld [vmem:[%s296 + $0xb4] sm:$0xf]
        %v328 = vld [vmem:[%s296 + $0xb8] sm:$0xf]
        %v329 = vld [vmem:[%s296 + $0x8] sm:$0x1]
        %v330 = vld [vmem:[%s296 + $0x14] sm:$0x1]
        %v331 = vld [vmem:[%s296 + $0x20] sm:$0x1]
        %v332 = vld [vmem:[%s296 + $0x2c] sm:$0x1]
        %v333 = vld [vmem:[%s296 + $0x38] sm:$0x1]
        %v334 = vld [vmem:[%s296 + $0x44] sm:$0x1]
        %v335 = vld [vmem:[%s296 + $0x50] sm:$0x1]
        %v336 = vld [vmem:[%s296 + $0x5c] sm:$0x1]
        %v337 = vld [vmem:[%s296 + $0x68] sm:$0x1]
        %v338 = vld [vmem:[%s296 + $0x74] sm:$0x1]
        %v339 = vld [vmem:[%s296 + $0x80] sm:$0x1]
        %v340 = vld [vmem:[%s296 + $0x8c] sm:$0x1]
        %v341 = vld [vmem:[%s296 + $0x98] sm:$0x1]
        %v342 = vld [vmem:[%s296 + $0xa4] sm:$0x1]
        %v343 = vld [vmem:[%s296 + $0xb0] sm:$0x1]
        %v344 = vld [vmem:[%s296 + $0xbc] sm:$0x1]
        %v345 = vld [vmem:[%s296] sm:$0xe]
        %v346 = vld [vmem:[%s296 + $0xc] sm:$0xe]
        %v347 = vld [vmem:[%s296 + $0x18] sm:$0xe]
        %v348 = vld [vmem:[%s296 + $0x24] sm:$0xe]
        %v349 = vld [vmem:[%s296 + $0x30] sm:$0xe]
        %v350 = vld [vmem:[%s296 + $0x3c] sm:$0xe]
        %v351 = vld [vmem:[%s296 + $0x48] sm:$0xe]
        %v352 = vld [vmem:[%s296 + $0x54] sm:$0xe]
        %v353 = vld [vmem:[%s296 + $0x60] sm:$0xe]
        %v354 = vld [vmem:[%s296 + $0x6c] sm:$0xe]
        %v355 = vld [vmem:[%s296 + $0x78] sm:$0xe]
        %v356 = vld [vmem:[%s296 + $0x84] sm:$0xe]
        %v357 = vld [vmem:[%s296 + $0x90] sm:$0xe]
        %v358 = vld [vmem:[%s296 + $0x9c] sm:$0xe]
        %v359 = vld [vmem:[%s296 + $0xa8] sm:$0xe]
        %v360 = vld [vmem:[%s296 + $0xb4] sm:$0xe]
        %s361 = sadd.s32 %s225, 2
        %s362 = smul.u32 %s361, 3
        %s363 = smul.addr %s362, 4
        %s364 = scalar_lea.vmem %s215, %s363
        %v365 = vld [vmem:[%s364] sm:$0xf]
        %v366 = vld [vmem:[%s364 + $0x4] sm:$0xf]
        %v367 = vld [vmem:[%s364 + $0xc] sm:$0xf]
        %v368 = vld [vmem:[%s364 + $0x10] sm:$0xf]
        %v369 = vld [vmem:[%s364 + $0x18] sm:$0xf]
        %v370 = vld [vmem:[%s364 + $0x1c] sm:$0xf]
        %v371 = vld [vmem:[%s364 + $0x24] sm:$0xf]
        %v372 = vld [vmem:[%s364 + $0x28] sm:$0xf]
        %v373 = vld [vmem:[%s364 + $0x30] sm:$0xf]
        %v374 = vld [vmem:[%s364 + $0x34] sm:$0xf]
        %v375 = vld [vmem:[%s364 + $0x3c] sm:$0xf]
        %v376 = vld [vmem:[%s364 + $0x40] sm:$0xf]
        %v377 = vld [vmem:[%s364 + $0x48] sm:$0xf]
        %v378 = vld [vmem:[%s364 + $0x4c] sm:$0xf]
        %v379 = vld [vmem:[%s364 + $0x54] sm:$0xf]
        %v380 = vld [vmem:[%s364 + $0x58] sm:$0xf]
        %v381 = vld [vmem:[%s364 + $0x60] sm:$0xf]
        %v382 = vld [vmem:[%s364 + $0x64] sm:$0xf]
        %v383 = vld [vmem:[%s364 + $0x6c] sm:$0xf]
        %v384 = vld [vmem:[%s364 + $0x70] sm:$0xf]
        %v385 = vld [vmem:[%s364 + $0x78] sm:$0xf]
        %v386 = vld [vmem:[%s364 + $0x7c] sm:$0xf]
        %v387 = vld [vmem:[%s364 + $0x84] sm:$0xf]
        %v388 = vld [vmem:[%s364 + $0x88] sm:$0xf]
        %v389 = vld [vmem:[%s364 + $0x90] sm:$0xf]
        %v390 = vld [vmem:[%s364 + $0x94] sm:$0xf]
        %v391 = vld [vmem:[%s364 + $0x9c] sm:$0xf]
        %v392 = vld [vmem:[%s364 + $0xa0] sm:$0xf]
        %v393 = vld [vmem:[%s364 + $0xa8] sm:$0xf]
        %v394 = vld [vmem:[%s364 + $0xac] sm:$0xf]
        %v395 = vld [vmem:[%s364 + $0xb4] sm:$0xf]
        %v396 = vld [vmem:[%s364 + $0xb8] sm:$0xf]
        %v397 = vld [vmem:[%s364 + $0x8] sm:$0x1]
        %v398 = vld [vmem:[%s364 + $0x14] sm:$0x1]
        %v399 = vld [vmem:[%s364 + $0x20] sm:$0x1]
        %v400 = vld [vmem:[%s364 + $0x2c] sm:$0x1]
        %v401 = vld [vmem:[%s364 + $0x38] sm:$0x1]
        %v402 = vld [vmem:[%s364 + $0x44] sm:$0x1]
        %v403 = vld [vmem:[%s364 + $0x50] sm:$0x1]
        %v404 = vld [vmem:[%s364 + $0x5c] sm:$0x1]
        %v405 = vld [vmem:[%s364 + $0x68] sm:$0x1]
        %v406 = vld [vmem:[%s364 + $0x74] sm:$0x1]
        %v407 = vld [vmem:[%s364 + $0x80] sm:$0x1]
        %v408 = vld [vmem:[%s364 + $0x8c] sm:$0x1]
        %v409 = vld [vmem:[%s364 + $0x98] sm:$0x1]
        %v410 = vld [vmem:[%s364 + $0xa4] sm:$0x1]
        %v411 = vld [vmem:[%s364 + $0xb0] sm:$0x1]
        %v412 = vld [vmem:[%s364 + $0xbc] sm:$0x1]
        %v413 = vld [vmem:[%s364] sm:$0xe]
        %v414 = vld [vmem:[%s364 + $0xc] sm:$0xe]
        %v415 = vld [vmem:[%s364 + $0x18] sm:$0xe]
        %v416 = vld [vmem:[%s364 + $0x24] sm:$0xe]
        %v417 = vld [vmem:[%s364 + $0x30] sm:$0xe]
        %v418 = vld [vmem:[%s364 + $0x3c] sm:$0xe]
        %v419 = vld [vmem:[%s364 + $0x48] sm:$0xe]
        %v420 = vld [vmem:[%s364 + $0x54] sm:$0xe]
        %v421 = vld [vmem:[%s364 + $0x60] sm:$0xe]
        %v422 = vld [vmem:[%s364 + $0x6c] sm:$0xe]
        %v423 = vld [vmem:[%s364 + $0x78] sm:$0xe]
        %v424 = vld [vmem:[%s364 + $0x84] sm:$0xe]
        %v425 = vld [vmem:[%s364 + $0x90] sm:$0xe]
        %v426 = vld [vmem:[%s364 + $0x9c] sm:$0xe]
        %v427 = vld [vmem:[%s364 + $0xa8] sm:$0xe]
        %v428 = vld [vmem:[%s364 + $0xb4] sm:$0xe]
        %v461 = vunpack.c.l.b16 %v229
        %v462 = vunpack.c.l.b16 %v230
        %v463 = vunpack.c.l.b16 %v231
        %v464 = vunpack.c.l.b16 %v232
        %v465 = vunpack.c.l.b16 %v233
        %v466 = vunpack.c.l.b16 %v234
        %v467 = vunpack.c.l.b16 %v235
        %v468 = vunpack.c.l.b16 %v236
        %v469 = vunpack.c.l.b16 %v237
        %v470 = vunpack.c.l.b16 %v238
        %v471 = vunpack.c.l.b16 %v239
        %v472 = vunpack.c.l.b16 %v240
        %v473 = vunpack.c.l.b16 %v241
        %v474 = vunpack.c.l.b16 %v242
        %v475 = vunpack.c.l.b16 %v243
        %v476 = vunpack.c.l.b16 %v244
        %v477 = vunpack.c.l.b16 %v245
        %v478 = vunpack.c.l.b16 %v246
        %v479 = vunpack.c.l.b16 %v247
        %v480 = vunpack.c.l.b16 %v248
        %v481 = vunpack.c.l.b16 %v249
        %v482 = vunpack.c.l.b16 %v250
        %v483 = vunpack.c.l.b16 %v251
        %v484 = vunpack.c.l.b16 %v252
        %v485 = vunpack.c.l.b16 %v253
        %v486 = vunpack.c.l.b16 %v254
        %v487 = vunpack.c.l.b16 %v255
        %v488 = vunpack.c.l.b16 %v256
        %v489 = vunpack.c.l.b16 %v257
        %v490 = vunpack.c.l.b16 %v258
        %v491 = vunpack.c.l.b16 %v259
        %v492 = vunpack.c.l.b16 %v260
        %v493 = vpack.c.b16 %v462, %v461
        %v494 = vpack.c.b16 %v464, %v463
        %v495 = vpack.c.b16 %v466, %v465
        %v496 = vpack.c.b16 %v468, %v467
        %v497 = vpack.c.b16 %v470, %v469
        %v498 = vpack.c.b16 %v472, %v471
        %v499 = vpack.c.b16 %v474, %v473
        %v500 = vpack.c.b16 %v476, %v475
        %v501 = vpack.c.b16 %v478, %v477
        %v502 = vpack.c.b16 %v480, %v479
        %v503 = vpack.c.b16 %v482, %v481
        %v504 = vpack.c.b16 %v484, %v483
        %v505 = vpack.c.b16 %v486, %v485
        %v506 = vpack.c.b16 %v488, %v487
        %v507 = vpack.c.b16 %v490, %v489
        %v508 = vpack.c.b16 %v492, %v491
        %v525 = vunpack.c.l.b16 %v261
        %v526 = vunpack.c.l.b16 %v262
        %v527 = vunpack.c.l.b16 %v263
        %v528 = vunpack.c.l.b16 %v264
        %v529 = vunpack.c.l.b16 %v265
        %v530 = vunpack.c.l.b16 %v266
        %v531 = vunpack.c.l.b16 %v267
        %v532 = vunpack.c.l.b16 %v268
        %v533 = vunpack.c.l.b16 %v269
        %v534 = vunpack.c.l.b16 %v270
        %v535 = vunpack.c.l.b16 %v271
        %v536 = vunpack.c.l.b16 %v272
        %v537 = vunpack.c.l.b16 %v273
        %v538 = vunpack.c.l.b16 %v274
        %v539 = vunpack.c.l.b16 %v275
        %v540 = vunpack.c.l.b16 %v276
        %v541 = vpack.c.b16 %v525, %v525
        %v542 = vpack.c.b16 %v526, %v526
        %v543 = vpack.c.b16 %v527, %v527
        %v544 = vpack.c.b16 %v528, %v528
        %v545 = vpack.c.b16 %v529, %v529
        %v546 = vpack.c.b16 %v530, %v530
        %v547 = vpack.c.b16 %v531, %v531
        %v548 = vpack.c.b16 %v532, %v532
        %v549 = vpack.c.b16 %v533, %v533
        %v550 = vpack.c.b16 %v534, %v534
        %v551 = vpack.c.b16 %v535, %v535
        %v552 = vpack.c.b16 %v536, %v536
        %v553 = vpack.c.b16 %v537, %v537
        %v554 = vpack.c.b16 %v538, %v538
        %v555 = vpack.c.b16 %v539, %v539
        %v556 = vpack.c.b16 %v540, %v540
        %vm557 = vsmask.f32 7424
        %v559 = vshrl.u32 %v493, 16
        %v561 = vshll.u32 %v493, 16
        %v563 = vrot.slane %v561, 1
        %v564 = vor.u32 %v559, %v563
        %v566 = vshll.u32 %v541, 16
        %v568 = vrot.slane %v566, 1
        %v569 = vsel %vm557, %v564, %v568
        %v571 = vshrl.u32 %v494, 16
        %v573 = vshll.u32 %v494, 16
        %v575 = vrot.slane %v573, 1
        %v576 = vor.u32 %v571, %v575
        %v578 = vshll.u32 %v542, 16
        %v580 = vrot.slane %v578, 1
        %v581 = vsel %vm557, %v576, %v580
        %v583 = vshrl.u32 %v495, 16
        %v585 = vshll.u32 %v495, 16
        %v587 = vrot.slane %v585, 1
        %v588 = vor.u32 %v583, %v587
        %v590 = vshll.u32 %v543, 16
        %v592 = vrot.slane %v590, 1
        %v593 = vsel %vm557, %v588, %v592
        %v595 = vshrl.u32 %v496, 16
        %v597 = vshll.u32 %v496, 16
        %v599 = vrot.slane %v597, 1
        %v600 = vor.u32 %v595, %v599
        %v602 = vshll.u32 %v544, 16
        %v604 = vrot.slane %v602, 1
        %v605 = vsel %vm557, %v600, %v604
        %v607 = vshrl.u32 %v497, 16
        %v609 = vshll.u32 %v497, 16
        %v611 = vrot.slane %v609, 1
        %v612 = vor.u32 %v607, %v611
        %v614 = vshll.u32 %v545, 16
        %v616 = vrot.slane %v614, 1
        %v617 = vsel %vm557, %v612, %v616
        %v619 = vshrl.u32 %v498, 16
        %v621 = vshll.u32 %v498, 16
        %v623 = vrot.slane %v621, 1
        %v624 = vor.u32 %v619, %v623
        %v626 = vshll.u32 %v546, 16
        %v628 = vrot.slane %v626, 1
        %v629 = vsel %vm557, %v624, %v628
        %v631 = vshrl.u32 %v499, 16
        %v633 = vshll.u32 %v499, 16
        %v635 = vrot.slane %v633, 1
        %v636 = vor.u32 %v631, %v635
        %v638 = vshll.u32 %v547, 16
        %v640 = vrot.slane %v638, 1
        %v641 = vsel %vm557, %v636, %v640
        %v643 = vshrl.u32 %v500, 16
        %v645 = vshll.u32 %v500, 16
        %v647 = vrot.slane %v645, 1
        %v648 = vor.u32 %v643, %v647
        %v650 = vshll.u32 %v548, 16
        %v652 = vrot.slane %v650, 1
        %v653 = vsel %vm557, %v648, %v652
        %v655 = vshrl.u32 %v501, 16
        %v657 = vshll.u32 %v501, 16
        %v659 = vrot.slane %v657, 1
        %v660 = vor.u32 %v655, %v659
        %v662 = vshll.u32 %v549, 16
        %v664 = vrot.slane %v662, 1
        %v665 = vsel %vm557, %v660, %v664
        %v667 = vshrl.u32 %v502, 16
        %v669 = vshll.u32 %v502, 16
        %v671 = vrot.slane %v669, 1
        %v672 = vor.u32 %v667, %v671
        %v674 = vshll.u32 %v550, 16
        %v676 = vrot.slane %v674, 1
        %v677 = vsel %vm557, %v672, %v676
        %v679 = vshrl.u32 %v503, 16
        %v681 = vshll.u32 %v503, 16
        %v683 = vrot.slane %v681, 1
        %v684 = vor.u32 %v679, %v683
        %v686 = vshll.u32 %v551, 16
        %v688 = vrot.slane %v686, 1
        %v689 = vsel %vm557, %v684, %v688
        %v691 = vshrl.u32 %v504, 16
        %v693 = vshll.u32 %v504, 16
        %v695 = vrot.slane %v693, 1
        %v696 = vor.u32 %v691, %v695
        %v698 = vshll.u32 %v552, 16
        %v700 = vrot.slane %v698, 1
        %v701 = vsel %vm557, %v696, %v700
        %v703 = vshrl.u32 %v505, 16
        %v705 = vshll.u32 %v505, 16
        %v707 = vrot.slane %v705, 1
        %v708 = vor.u32 %v703, %v707
        %v710 = vshll.u32 %v553, 16
        %v712 = vrot.slane %v710, 1
        %v713 = vsel %vm557, %v708, %v712
        %v715 = vshrl.u32 %v506, 16
        %v717 = vshll.u32 %v506, 16
        %v719 = vrot.slane %v717, 1
        %v720 = vor.u32 %v715, %v719
        %v722 = vshll.u32 %v554, 16
        %v724 = vrot.slane %v722, 1
        %v725 = vsel %vm557, %v720, %v724
        %v727 = vshrl.u32 %v507, 16
        %v729 = vshll.u32 %v507, 16
        %v731 = vrot.slane %v729, 1
        %v732 = vor.u32 %v727, %v731
        %v734 = vshll.u32 %v555, 16
        %v736 = vrot.slane %v734, 1
        %v737 = vsel %vm557, %v732, %v736
        %v739 = vshrl.u32 %v508, 16
        %v741 = vshll.u32 %v508, 16
        %v743 = vrot.slane %v741, 1
        %v744 = vor.u32 %v739, %v743
        %v746 = vshll.u32 %v556, 16
        %v748 = vrot.slane %v746, 1
        %v749 = vsel %vm557, %v744, %v748
        %750 = vrot.lane.b32.xlu0 %v569, 4
        %v751 = vpop.permute.xlu0 %750
        %752 = vrot.lane.b32.xlu0 %v581, 4
        %v753 = vpop.permute.xlu0 %752
        %754 = vrot.lane.b32.xlu0 %v593, 4
        %v755 = vpop.permute.xlu0 %754
        %756 = vrot.lane.b32.xlu0 %v605, 4
        %v757 = vpop.permute.xlu0 %756
        %758 = vrot.lane.b32.xlu0 %v617, 4
        %v759 = vpop.permute.xlu0 %758
        %760 = vrot.lane.b32.xlu0 %v629, 4
        %v761 = vpop.permute.xlu0 %760
        %762 = vrot.lane.b32.xlu0 %v641, 4
        %v763 = vpop.permute.xlu0 %762
        %764 = vrot.lane.b32.xlu0 %v653, 4
        %v765 = vpop.permute.xlu0 %764
        %766 = vrot.lane.b32.xlu0 %v665, 4
        %v767 = vpop.permute.xlu0 %766
        %768 = vrot.lane.b32.xlu0 %v677, 4
        %v769 = vpop.permute.xlu0 %768
        %770 = vrot.lane.b32.xlu0 %v689, 4
        %v771 = vpop.permute.xlu0 %770
        %772 = vrot.lane.b32.xlu0 %v701, 4
        %v773 = vpop.permute.xlu0 %772
        %774 = vrot.lane.b32.xlu0 %v713, 4
        %v775 = vpop.permute.xlu0 %774
        %776 = vrot.lane.b32.xlu0 %v725, 4
        %v777 = vpop.permute.xlu0 %776
        %778 = vrot.lane.b32.xlu0 %v737, 4
        %v779 = vpop.permute.xlu0 %778
        %780 = vrot.lane.b32.xlu0 %v749, 4
        %v781 = vpop.permute.xlu0 %780
        %v798 = vunpack.c.l.b16 %v277
        %v799 = vunpack.c.l.b16 %v278
        %v800 = vunpack.c.l.b16 %v279
        %v801 = vunpack.c.l.b16 %v280
        %v802 = vunpack.c.l.b16 %v281
        %v803 = vunpack.c.l.b16 %v282
        %v804 = vunpack.c.l.b16 %v283
        %v805 = vunpack.c.l.b16 %v284
        %v806 = vunpack.c.l.b16 %v285
        %v807 = vunpack.c.l.b16 %v286
        %v808 = vunpack.c.l.b16 %v287
        %v809 = vunpack.c.l.b16 %v288
        %v810 = vunpack.c.l.b16 %v289
        %v811 = vunpack.c.l.b16 %v290
        %v812 = vunpack.c.l.b16 %v291
        %v813 = vunpack.c.l.b16 %v292
        %v814 = vpack.c.b16 %v462, %v798
        %v815 = vpack.c.b16 %v464, %v799
        %v816 = vpack.c.b16 %v466, %v800
        %v817 = vpack.c.b16 %v468, %v801
        %v818 = vpack.c.b16 %v470, %v802
        %v819 = vpack.c.b16 %v472, %v803
        %v820 = vpack.c.b16 %v474, %v804
        %v821 = vpack.c.b16 %v476, %v805
        %v822 = vpack.c.b16 %v478, %v806
        %v823 = vpack.c.b16 %v480, %v807
        %v824 = vpack.c.b16 %v482, %v808
        %v825 = vpack.c.b16 %v484, %v809
        %v826 = vpack.c.b16 %v486, %v810
        %v827 = vpack.c.b16 %v488, %v811
        %v828 = vpack.c.b16 %v490, %v812
        %v829 = vpack.c.b16 %v492, %v813
        %vm830 = vcmask 1046528
        %v831 = vrot.slane %v814, 1
        %v832 = vrot.slane %v541, 1
        %v833 = vsel %vm830, %v831, %v832
        %v834 = vrot.slane %v815, 1
        %v835 = vrot.slane %v542, 1
        %v836 = vsel %vm830, %v834, %v835
        %v837 = vrot.slane %v816, 1
        %v838 = vrot.slane %v543, 1
        %v839 = vsel %vm830, %v837, %v838
        %v840 = vrot.slane %v817, 1
        %v841 = vrot.slane %v544, 1
        %v842 = vsel %vm830, %v840, %v841
        %v843 = vrot.slane %v818, 1
        %v844 = vrot.slane %v545, 1
        %v845 = vsel %vm830, %v843, %v844
        %v846 = vrot.slane %v819, 1
        %v847 = vrot.slane %v546, 1
        %v848 = vsel %vm830, %v846, %v847
        %v849 = vrot.slane %v820, 1
        %v850 = vrot.slane %v547, 1
        %v851 = vsel %vm830, %v849, %v850
        %v852 = vrot.slane %v821, 1
        %v853 = vrot.slane %v548, 1
        %v854 = vsel %vm830, %v852, %v853
        %v855 = vrot.slane %v822, 1
        %v856 = vrot.slane %v549, 1
        %v857 = vsel %vm830, %v855, %v856
        %v858 = vrot.slane %v823, 1
        %v859 = vrot.slane %v550, 1
        %v860 = vsel %vm830, %v858, %v859
        %v861 = vrot.slane %v824, 1
        %v862 = vrot.slane %v551, 1
        %v863 = vsel %vm830, %v861, %v862
        %v864 = vrot.slane %v825, 1
        %v865 = vrot.slane %v552, 1
        %v866 = vsel %vm830, %v864, %v865
        %v867 = vrot.slane %v826, 1
        %v868 = vrot.slane %v553, 1
        %v869 = vsel %vm830, %v867, %v868
        %v870 = vrot.slane %v827, 1
        %v871 = vrot.slane %v554, 1
        %v872 = vsel %vm830, %v870, %v871
        %v873 = vrot.slane %v828, 1
        %v874 = vrot.slane %v555, 1
        %v875 = vsel %vm830, %v873, %v874
        %v876 = vrot.slane %v829, 1
        %v877 = vrot.slane %v556, 1
        %v878 = vsel %vm830, %v876, %v877
        %879 = vrot.lane.b32.xlu0 %v833, 8
        %v880 = vpop.permute.xlu0 %879
        %881 = vrot.lane.b32.xlu0 %v836, 8
        %v882 = vpop.permute.xlu0 %881
        %883 = vrot.lane.b32.xlu0 %v839, 8
        %v884 = vpop.permute.xlu0 %883
        %885 = vrot.lane.b32.xlu0 %v842, 8
        %v886 = vpop.permute.xlu0 %885
        %887 = vrot.lane.b32.xlu0 %v845, 8
        %v888 = vpop.permute.xlu0 %887
        %889 = vrot.lane.b32.xlu0 %v848, 8
        %v890 = vpop.permute.xlu0 %889
        %891 = vrot.lane.b32.xlu0 %v851, 8
        %v892 = vpop.permute.xlu0 %891
        %893 = vrot.lane.b32.xlu0 %v854, 8
        %v894 = vpop.permute.xlu0 %893
        %895 = vrot.lane.b32.xlu0 %v857, 8
        %v896 = vpop.permute.xlu0 %895
        %897 = vrot.lane.b32.xlu0 %v860, 8
        %v898 = vpop.permute.xlu0 %897
        %899 = vrot.lane.b32.xlu0 %v863, 8
        %v900 = vpop.permute.xlu0 %899
        %901 = vrot.lane.b32.xlu0 %v866, 8
        %v902 = vpop.permute.xlu0 %901
        %903 = vrot.lane.b32.xlu0 %v869, 8
        %v904 = vpop.permute.xlu0 %903
        %905 = vrot.lane.b32.xlu0 %v872, 8
        %v906 = vpop.permute.xlu0 %905
        %907 = vrot.lane.b32.xlu0 %v875, 8
        %v908 = vpop.permute.xlu0 %907
        %909 = vrot.lane.b32.xlu0 %v878, 8
        %v910 = vpop.permute.xlu0 %909
        %v943 = vunpack.c.l.b16 %v297
        %v944 = vunpack.c.l.b16 %v298
        %v945 = vunpack.c.l.b16 %v299
        %v946 = vunpack.c.l.b16 %v300
        %v947 = vunpack.c.l.b16 %v301
        %v948 = vunpack.c.l.b16 %v302
        %v949 = vunpack.c.l.b16 %v303
        %v950 = vunpack.c.l.b16 %v304
        %v951 = vunpack.c.l.b16 %v305
        %v952 = vunpack.c.l.b16 %v306
        %v953 = vunpack.c.l.b16 %v307
        %v954 = vunpack.c.l.b16 %v308
        %v955 = vunpack.c.l.b16 %v309
        %v956 = vunpack.c.l.b16 %v310
        %v957 = vunpack.c.l.b16 %v311
        %v958 = vunpack.c.l.b16 %v312
        %v959 = vunpack.c.l.b16 %v313
        %v960 = vunpack.c.l.b16 %v314
        %v961 = vunpack.c.l.b16 %v315
        %v962 = vunpack.c.l.b16 %v316
        %v963 = vunpack.c.l.b16 %v317
        %v964 = vunpack.c.l.b16 %v318
        %v965 = vunpack.c.l.b16 %v319
        %v966 = vunpack.c.l.b16 %v320
        %v967 = vunpack.c.l.b16 %v321
        %v968 = vunpack.c.l.b16 %v322
        %v969 = vunpack.c.l.b16 %v323
        %v970 = vunpack.c.l.b16 %v324
        %v971 = vunpack.c.l.b16 %v325
        %v972 = vunpack.c.l.b16 %v326
        %v973 = vunpack.c.l.b16 %v327
        %v974 = vunpack.c.l.b16 %v328
        %v975 = vpack.c.b16 %v944, %v943
        %v976 = vpack.c.b16 %v946, %v945
        %v977 = vpack.c.b16 %v948, %v947
        %v978 = vpack.c.b16 %v950, %v949
        %v979 = vpack.c.b16 %v952, %v951
        %v980 = vpack.c.b16 %v954, %v953
        %v981 = vpack.c.b16 %v956, %v955
        %v982 = vpack.c.b16 %v958, %v957
        %v983 = vpack.c.b16 %v960, %v959
        %v984 = vpack.c.b16 %v962, %v961
        %v985 = vpack.c.b16 %v964, %v963
        %v986 = vpack.c.b16 %v966, %v965
        %v987 = vpack.c.b16 %v968, %v967
        %v988 = vpack.c.b16 %v970, %v969
        %v989 = vpack.c.b16 %v972, %v971
        %v990 = vpack.c.b16 %v974, %v973
        %991 = vrot.lane.b32.xlu0 %v975, 12
        %v992 = vpop.permute.xlu0 %991
        %993 = vrot.lane.b32.xlu0 %v976, 12
        %v994 = vpop.permute.xlu0 %993
        %995 = vrot.lane.b32.xlu0 %v977, 12
        %v996 = vpop.permute.xlu0 %995
        %997 = vrot.lane.b32.xlu0 %v978, 12
        %v998 = vpop.permute.xlu0 %997
        %999 = vrot.lane.b32.xlu0 %v979, 12
        %v1000 = vpop.permute.xlu0 %999
        %1001 = vrot.lane.b32.xlu0 %v980, 12
        %v1002 = vpop.permute.xlu0 %1001
        %1003 = vrot.lane.b32.xlu0 %v981, 12
        %v1004 = vpop.permute.xlu0 %1003
        %1005 = vrot.lane.b32.xlu0 %v982, 12
        %v1006 = vpop.permute.xlu0 %1005
        %1007 = vrot.lane.b32.xlu0 %v983, 12
        %v1008 = vpop.permute.xlu0 %1007
        %1009 = vrot.lane.b32.xlu0 %v984, 12
        %v1010 = vpop.permute.xlu0 %1009
        %1011 = vrot.lane.b32.xlu0 %v985, 12
        %v1012 = vpop.permute.xlu0 %1011
        %1013 = vrot.lane.b32.xlu0 %v986, 12
        %v1014 = vpop.permute.xlu0 %1013
        %1015 = vrot.lane.b32.xlu0 %v987, 12
        %v1016 = vpop.permute.xlu0 %1015
        %1017 = vrot.lane.b32.xlu0 %v988, 12
        %v1018 = vpop.permute.xlu0 %1017
        %1019 = vrot.lane.b32.xlu0 %v989, 12
        %v1020 = vpop.permute.xlu0 %1019
        %1021 = vrot.lane.b32.xlu0 %v990, 12
        %v1022 = vpop.permute.xlu0 %1021
        %v1039 = vunpack.c.l.b16 %v329
        %v1040 = vunpack.c.l.b16 %v330
        %v1041 = vunpack.c.l.b16 %v331
        %v1042 = vunpack.c.l.b16 %v332
        %v1043 = vunpack.c.l.b16 %v333
        %v1044 = vunpack.c.l.b16 %v334
        %v1045 = vunpack.c.l.b16 %v335
        %v1046 = vunpack.c.l.b16 %v336
        %v1047 = vunpack.c.l.b16 %v337
        %v1048 = vunpack.c.l.b16 %v338
        %v1049 = vunpack.c.l.b16 %v339
        %v1050 = vunpack.c.l.b16 %v340
        %v1051 = vunpack.c.l.b16 %v341
        %v1052 = vunpack.c.l.b16 %v342
        %v1053 = vunpack.c.l.b16 %v343
        %v1054 = vunpack.c.l.b16 %v344
        %v1055 = vpack.c.b16 %v1039, %v1039
        %v1056 = vpack.c.b16 %v1040, %v1040
        %v1057 = vpack.c.b16 %v1041, %v1041
        %v1058 = vpack.c.b16 %v1042, %v1042
        %v1059 = vpack.c.b16 %v1043, %v1043
        %v1060 = vpack.c.b16 %v1044, %v1044
        %v1061 = vpack.c.b16 %v1045, %v1045
        %v1062 = vpack.c.b16 %v1046, %v1046
        %v1063 = vpack.c.b16 %v1047, %v1047
        %v1064 = vpack.c.b16 %v1048, %v1048
        %v1065 = vpack.c.b16 %v1049, %v1049
        %v1066 = vpack.c.b16 %v1050, %v1050
        %v1067 = vpack.c.b16 %v1051, %v1051
        %v1068 = vpack.c.b16 %v1052, %v1052
        %v1069 = vpack.c.b16 %v1053, %v1053
        %v1070 = vpack.c.b16 %v1054, %v1054
        %v1072 = vshrl.u32 %v975, 16
        %v1074 = vshll.u32 %v975, 16
        %v1076 = vrot.slane %v1074, 1
        %v1077 = vor.u32 %v1072, %v1076
        %v1079 = vshll.u32 %v1055, 16
        %v1081 = vrot.slane %v1079, 1
        %v1082 = vsel %vm557, %v1077, %v1081
        %v1084 = vshrl.u32 %v976, 16
        %v1086 = vshll.u32 %v976, 16
        %v1088 = vrot.slane %v1086, 1
        %v1089 = vor.u32 %v1084, %v1088
        %v1091 = vshll.u32 %v1056, 16
        %v1093 = vrot.slane %v1091, 1
        %v1094 = vsel %vm557, %v1089, %v1093
        %v1096 = vshrl.u32 %v977, 16
        %v1098 = vshll.u32 %v977, 16
        %v1100 = vrot.slane %v1098, 1
        %v1101 = vor.u32 %v1096, %v1100
        %v1103 = vshll.u32 %v1057, 16
        %v1105 = vrot.slane %v1103, 1
        %v1106 = vsel %vm557, %v1101, %v1105
        %v1108 = vshrl.u32 %v978, 16
        %v1110 = vshll.u32 %v978, 16
        %v1112 = vrot.slane %v1110, 1
        %v1113 = vor.u32 %v1108, %v1112
        %v1115 = vshll.u32 %v1058, 16
        %v1117 = vrot.slane %v1115, 1
        %v1118 = vsel %vm557, %v1113, %v1117
        %v1120 = vshrl.u32 %v979, 16
        %v1122 = vshll.u32 %v979, 16
        %v1124 = vrot.slane %v1122, 1
        %v1125 = vor.u32 %v1120, %v1124
        %v1127 = vshll.u32 %v1059, 16
        %v1129 = vrot.slane %v1127, 1
        %v1130 = vsel %vm557, %v1125, %v1129
        %v1132 = vshrl.u32 %v980, 16
        %v1134 = vshll.u32 %v980, 16
        %v1136 = vrot.slane %v1134, 1
        %v1137 = vor.u32 %v1132, %v1136
        %v1139 = vshll.u32 %v1060, 16
        %v1141 = vrot.slane %v1139, 1
        %v1142 = vsel %vm557, %v1137, %v1141
        %v1144 = vshrl.u32 %v981, 16
        %v1146 = vshll.u32 %v981, 16
        %v1148 = vrot.slane %v1146, 1
        %v1149 = vor.u32 %v1144, %v1148
        %v1151 = vshll.u32 %v1061, 16
        %v1153 = vrot.slane %v1151, 1
        %v1154 = vsel %vm557, %v1149, %v1153
        %v1156 = vshrl.u32 %v982, 16
        %v1158 = vshll.u32 %v982, 16
        %v1160 = vrot.slane %v1158, 1
        %v1161 = vor.u32 %v1156, %v1160
        %v1163 = vshll.u32 %v1062, 16
        %v1165 = vrot.slane %v1163, 1
        %v1166 = vsel %vm557, %v1161, %v1165
        %v1168 = vshrl.u32 %v983, 16
        %v1170 = vshll.u32 %v983, 16
        %v1172 = vrot.slane %v1170, 1
        %v1173 = vor.u32 %v1168, %v1172
        %v1175 = vshll.u32 %v1063, 16
        %v1177 = vrot.slane %v1175, 1
        %v1178 = vsel %vm557, %v1173, %v1177
        %v1180 = vshrl.u32 %v984, 16
        %v1182 = vshll.u32 %v984, 16
        %v1184 = vrot.slane %v1182, 1
        %v1185 = vor.u32 %v1180, %v1184
        %v1187 = vshll.u32 %v1064, 16
        %v1189 = vrot.slane %v1187, 1
        %v1190 = vsel %vm557, %v1185, %v1189
        %v1192 = vshrl.u32 %v985, 16
        %v1194 = vshll.u32 %v985, 16
        %v1196 = vrot.slane %v1194, 1
        %v1197 = vor.u32 %v1192, %v1196
        %v1199 = vshll.u32 %v1065, 16
        %v1201 = vrot.slane %v1199, 1
        %v1202 = vsel %vm557, %v1197, %v1201
        %v1204 = vshrl.u32 %v986, 16
        %v1206 = vshll.u32 %v986, 16
        %v1208 = vrot.slane %v1206, 1
        %v1209 = vor.u32 %v1204, %v1208
        %v1211 = vshll.u32 %v1066, 16
        %v1213 = vrot.slane %v1211, 1
        %v1214 = vsel %vm557, %v1209, %v1213
        %v1216 = vshrl.u32 %v987, 16
        %v1218 = vshll.u32 %v987, 16
        %v1220 = vrot.slane %v1218, 1
        %v1221 = vor.u32 %v1216, %v1220
        %v1223 = vshll.u32 %v1067, 16
        %v1225 = vrot.slane %v1223, 1
        %v1226 = vsel %vm557, %v1221, %v1225
        %v1228 = vshrl.u32 %v988, 16
        %v1230 = vshll.u32 %v988, 16
        %v1232 = vrot.slane %v1230, 1
        %v1233 = vor.u32 %v1228, %v1232
        %v1235 = vshll.u32 %v1068, 16
        %v1237 = vrot.slane %v1235, 1
        %v1238 = vsel %vm557, %v1233, %v1237
        %v1240 = vshrl.u32 %v989, 16
        %v1242 = vshll.u32 %v989, 16
        %v1244 = vrot.slane %v1242, 1
        %v1245 = vor.u32 %v1240, %v1244
        %v1247 = vshll.u32 %v1069, 16
        %v1249 = vrot.slane %v1247, 1
        %v1250 = vsel %vm557, %v1245, %v1249
        %v1252 = vshrl.u32 %v990, 16
        %v1254 = vshll.u32 %v990, 16
        %v1256 = vrot.slane %v1254, 1
        %v1257 = vor.u32 %v1252, %v1256
        %v1259 = vshll.u32 %v1070, 16
        %v1261 = vrot.slane %v1259, 1
        %v1262 = vsel %vm557, %v1257, %v1261
        %1263 = vrot.lane.b32.xlu0 %v1082, 16
        %v1264 = vpop.permute.xlu0 %1263
        %1265 = vrot.lane.b32.xlu0 %v1094, 16
        %v1266 = vpop.permute.xlu0 %1265
        %1267 = vrot.lane.b32.xlu0 %v1106, 16
        %v1268 = vpop.permute.xlu0 %1267
        %1269 = vrot.lane.b32.xlu0 %v1118, 16
        %v1270 = vpop.permute.xlu0 %1269
        %1271 = vrot.lane.b32.xlu0 %v1130, 16
        %v1272 = vpop.permute.xlu0 %1271
        %1273 = vrot.lane.b32.xlu0 %v1142, 16
        %v1274 = vpop.permute.xlu0 %1273
        %1275 = vrot.lane.b32.xlu0 %v1154, 16
        %v1276 = vpop.permute.xlu0 %1275
        %1277 = vrot.lane.b32.xlu0 %v1166, 16
        %v1278 = vpop.permute.xlu0 %1277
        %1279 = vrot.lane.b32.xlu0 %v1178, 16
        %v1280 = vpop.permute.xlu0 %1279
        %1281 = vrot.lane.b32.xlu0 %v1190, 16
        %v1282 = vpop.permute.xlu0 %1281
        %1283 = vrot.lane.b32.xlu0 %v1202, 16
        %v1284 = vpop.permute.xlu0 %1283
        %1285 = vrot.lane.b32.xlu0 %v1214, 16
        %v1286 = vpop.permute.xlu0 %1285
        %1287 = vrot.lane.b32.xlu0 %v1226, 16
        %v1288 = vpop.permute.xlu0 %1287
        %1289 = vrot.lane.b32.xlu0 %v1238, 16
        %v1290 = vpop.permute.xlu0 %1289
        %1291 = vrot.lane.b32.xlu0 %v1250, 16
        %v1292 = vpop.permute.xlu0 %1291
        %1293 = vrot.lane.b32.xlu0 %v1262, 16
        %v1294 = vpop.permute.xlu0 %1293
        %v1311 = vunpack.c.l.b16 %v345
        %v1312 = vunpack.c.l.b16 %v346
        %v1313 = vunpack.c.l.b16 %v347
        %v1314 = vunpack.c.l.b16 %v348
        %v1315 = vunpack.c.l.b16 %v349
        %v1316 = vunpack.c.l.b16 %v350
        %v1317 = vunpack.c.l.b16 %v351
        %v1318 = vunpack.c.l.b16 %v352
        %v1319 = vunpack.c.l.b16 %v353
        %v1320 = vunpack.c.l.b16 %v354
        %v1321 = vunpack.c.l.b16 %v355
        %v1322 = vunpack.c.l.b16 %v356
        %v1323 = vunpack.c.l.b16 %v357
        %v1324 = vunpack.c.l.b16 %v358
        %v1325 = vunpack.c.l.b16 %v359
        %v1326 = vunpack.c.l.b16 %v360
        %v1327 = vpack.c.b16 %v944, %v1311
        %v1328 = vpack.c.b16 %v946, %v1312
        %v1329 = vpack.c.b16 %v948, %v1313
        %v1330 = vpack.c.b16 %v950, %v1314
        %v1331 = vpack.c.b16 %v952, %v1315
        %v1332 = vpack.c.b16 %v954, %v1316
        %v1333 = vpack.c.b16 %v956, %v1317
        %v1334 = vpack.c.b16 %v958, %v1318
        %v1335 = vpack.c.b16 %v960, %v1319
        %v1336 = vpack.c.b16 %v962, %v1320
        %v1337 = vpack.c.b16 %v964, %v1321
        %v1338 = vpack.c.b16 %v966, %v1322
        %v1339 = vpack.c.b16 %v968, %v1323
        %v1340 = vpack.c.b16 %v970, %v1324
        %v1341 = vpack.c.b16 %v972, %v1325
        %v1342 = vpack.c.b16 %v974, %v1326
        %v1343 = vrot.slane %v1327, 1
        %v1344 = vrot.slane %v1055, 1
        %v1345 = vsel %vm830, %v1343, %v1344
        %v1346 = vrot.slane %v1328, 1
        %v1347 = vrot.slane %v1056, 1
        %v1348 = vsel %vm830, %v1346, %v1347
        %v1349 = vrot.slane %v1329, 1
        %v1350 = vrot.slane %v1057, 1
        %v1351 = vsel %vm830, %v1349, %v1350
        %v1352 = vrot.slane %v1330, 1
        %v1353 = vrot.slane %v1058, 1
        %v1354 = vsel %vm830, %v1352, %v1353
        %v1355 = vrot.slane %v1331, 1
        %v1356 = vrot.slane %v1059, 1
        %v1357 = vsel %vm830, %v1355, %v1356
        %v1358 = vrot.slane %v1332, 1
        %v1359 = vrot.slane %v1060, 1
        %v1360 = vsel %vm830, %v1358, %v1359
        %v1361 = vrot.slane %v1333, 1
        %v1362 = vrot.slane %v1061, 1
        %v1363 = vsel %vm830, %v1361, %v1362
        %v1364 = vrot.slane %v1334, 1
        %v1365 = vrot.slane %v1062, 1
        %v1366 = vsel %vm830, %v1364, %v1365
        %v1367 = vrot.slane %v1335, 1
        %v1368 = vrot.slane %v1063, 1
        %v1369 = vsel %vm830, %v1367, %v1368
        %v1370 = vrot.slane %v1336, 1
        %v1371 = vrot.slane %v1064, 1
        %v1372 = vsel %vm830, %v1370, %v1371
        %v1373 = vrot.slane %v1337, 1
        %v1374 = vrot.slane %v1065, 1
        %v1375 = vsel %vm830, %v1373, %v1374
        %v1376 = vrot.slane %v1338, 1
        %v1377 = vrot.slane %v1066, 1
        %v1378 = vsel %vm830, %v1376, %v1377
        %v1379 = vrot.slane %v1339, 1
        %v1380 = vrot.slane %v1067, 1
        %v1381 = vsel %vm830, %v1379, %v1380
        %v1382 = vrot.slane %v1340, 1
        %v1383 = vrot.slane %v1068, 1
        %v1384 = vsel %vm830, %v1382, %v1383
        %v1385 = vrot.slane %v1341, 1
        %v1386 = vrot.slane %v1069, 1
        %v1387 = vsel %vm830, %v1385, %v1386
        %v1388 = vrot.slane %v1342, 1
        %v1389 = vrot.slane %v1070, 1
        %v1390 = vsel %vm830, %v1388, %v1389
        %1391 = vrot.lane.b32.xlu0 %v1345, 20
        %v1392 = vpop.permute.xlu0 %1391
        %1393 = vrot.lane.b32.xlu0 %v1348, 20
        %v1394 = vpop.permute.xlu0 %1393
        %1395 = vrot.lane.b32.xlu0 %v1351, 20
        %v1396 = vpop.permute.xlu0 %1395
        %1397 = vrot.lane.b32.xlu0 %v1354, 20
        %v1398 = vpop.permute.xlu0 %1397
        %1399 = vrot.lane.b32.xlu0 %v1357, 20
        %v1400 = vpop.permute.xlu0 %1399
        %1401 = vrot.lane.b32.xlu0 %v1360, 20
        %v1402 = vpop.permute.xlu0 %1401
        %1403 = vrot.lane.b32.xlu0 %v1363, 20
        %v1404 = vpop.permute.xlu0 %1403
        %1405 = vrot.lane.b32.xlu0 %v1366, 20
        %v1406 = vpop.permute.xlu0 %1405
        %1407 = vrot.lane.b32.xlu0 %v1369, 20
        %v1408 = vpop.permute.xlu0 %1407
        %1409 = vrot.lane.b32.xlu0 %v1372, 20
        %v1410 = vpop.permute.xlu0 %1409
        %1411 = vrot.lane.b32.xlu0 %v1375, 20
        %v1412 = vpop.permute.xlu0 %1411
        %1413 = vrot.lane.b32.xlu0 %v1378, 20
        %v1414 = vpop.permute.xlu0 %1413
        %1415 = vrot.lane.b32.xlu0 %v1381, 20
        %v1416 = vpop.permute.xlu0 %1415
        %1417 = vrot.lane.b32.xlu0 %v1384, 20
        %v1418 = vpop.permute.xlu0 %1417
        %1419 = vrot.lane.b32.xlu0 %v1387, 20
        %v1420 = vpop.permute.xlu0 %1419
        %1421 = vrot.lane.b32.xlu0 %v1390, 20
        %v1422 = vpop.permute.xlu0 %1421
        %v1455 = vunpack.c.l.b16 %v365
        %v1456 = vunpack.c.l.b16 %v366
        %v1457 = vunpack.c.l.b16 %v367
        %v1458 = vunpack.c.l.b16 %v368
        %v1459 = vunpack.c.l.b16 %v369
        %v1460 = vunpack.c.l.b16 %v370
        %v1461 = vunpack.c.l.b16 %v371
        %v1462 = vunpack.c.l.b16 %v372
        %v1463 = vunpack.c.l.b16 %v373
        %v1464 = vunpack.c.l.b16 %v374
        %v1465 = vunpack.c.l.b16 %v375
        %v1466 = vunpack.c.l.b16 %v376
        %v1467 = vunpack.c.l.b16 %v377
        %v1468 = vunpack.c.l.b16 %v378
        %v1469 = vunpack.c.l.b16 %v379
        %v1470 = vunpack.c.l.b16 %v380
        %v1471 = vunpack.c.l.b16 %v381
        %v1472 = vunpack.c.l.b16 %v382
        %v1473 = vunpack.c.l.b16 %v383
        %v1474 = vunpack.c.l.b16 %v384
        %v1475 = vunpack.c.l.b16 %v385
        %v1476 = vunpack.c.l.b16 %v386
        %v1477 = vunpack.c.l.b16 %v387
        %v1478 = vunpack.c.l.b16 %v388
        %v1479 = vunpack.c.l.b16 %v389
        %v1480 = vunpack.c.l.b16 %v390
        %v1481 = vunpack.c.l.b16 %v391
        %v1482 = vunpack.c.l.b16 %v392
        %v1483 = vunpack.c.l.b16 %v393
        %v1484 = vunpack.c.l.b16 %v394
        %v1485 = vunpack.c.l.b16 %v395
        %v1486 = vunpack.c.l.b16 %v396
        %v1487 = vpack.c.b16 %v1456, %v1455
        %v1488 = vpack.c.b16 %v1458, %v1457
        %v1489 = vpack.c.b16 %v1460, %v1459
        %v1490 = vpack.c.b16 %v1462, %v1461
        %v1491 = vpack.c.b16 %v1464, %v1463
        %v1492 = vpack.c.b16 %v1466, %v1465
        %v1493 = vpack.c.b16 %v1468, %v1467
        %v1494 = vpack.c.b16 %v1470, %v1469
        %v1495 = vpack.c.b16 %v1472, %v1471
        %v1496 = vpack.c.b16 %v1474, %v1473
        %v1497 = vpack.c.b16 %v1476, %v1475
        %v1498 = vpack.c.b16 %v1478, %v1477
        %v1499 = vpack.c.b16 %v1480, %v1479
        %v1500 = vpack.c.b16 %v1482, %v1481
        %v1501 = vpack.c.b16 %v1484, %v1483
        %v1502 = vpack.c.b16 %v1486, %v1485
        %1503 = vrot.lane.b32.xlu0 %v1487, 24
        %v1504 = vpop.permute.xlu0 %1503
        %1505 = vrot.lane.b32.xlu0 %v1488, 24
        %v1506 = vpop.permute.xlu0 %1505
        %1507 = vrot.lane.b32.xlu0 %v1489, 24
        %v1508 = vpop.permute.xlu0 %1507
        %1509 = vrot.lane.b32.xlu0 %v1490, 24
        %v1510 = vpop.permute.xlu0 %1509
        %1511 = vrot.lane.b32.xlu0 %v1491, 24
        %v1512 = vpop.permute.xlu0 %1511
        %1513 = vrot.lane.b32.xlu0 %v1492, 24
        %v1514 = vpop.permute.xlu0 %1513
        %1515 = vrot.lane.b32.xlu0 %v1493, 24
        %v1516 = vpop.permute.xlu0 %1515
        %1517 = vrot.lane.b32.xlu0 %v1494, 24
        %v1518 = vpop.permute.xlu0 %1517
        %1519 = vrot.lane.b32.xlu0 %v1495, 24
        %v1520 = vpop.permute.xlu0 %1519
        %1521 = vrot.lane.b32.xlu0 %v1496, 24
        %v1522 = vpop.permute.xlu0 %1521
        %1523 = vrot.lane.b32.xlu0 %v1497, 24
        %v1524 = vpop.permute.xlu0 %1523
        %1525 = vrot.lane.b32.xlu0 %v1498, 24
        %v1526 = vpop.permute.xlu0 %1525
        %1527 = vrot.lane.b32.xlu0 %v1499, 24
        %v1528 = vpop.permute.xlu0 %1527
        %1529 = vrot.lane.b32.xlu0 %v1500, 24
        %v1530 = vpop.permute.xlu0 %1529
        %1531 = vrot.lane.b32.xlu0 %v1501, 24
        %v1532 = vpop.permute.xlu0 %1531
        %1533 = vrot.lane.b32.xlu0 %v1502, 24
        %v1534 = vpop.permute.xlu0 %1533
        %v1551 = vunpack.c.l.b16 %v397
        %v1552 = vunpack.c.l.b16 %v398
        %v1553 = vunpack.c.l.b16 %v399
        %v1554 = vunpack.c.l.b16 %v400
        %v1555 = vunpack.c.l.b16 %v401
        %v1556 = vunpack.c.l.b16 %v402
        %v1557 = vunpack.c.l.b16 %v403
        %v1558 = vunpack.c.l.b16 %v404
        %v1559 = vunpack.c.l.b16 %v405
        %v1560 = vunpack.c.l.b16 %v406
        %v1561 = vunpack.c.l.b16 %v407
        %v1562 = vunpack.c.l.b16 %v408
        %v1563 = vunpack.c.l.b16 %v409
        %v1564 = vunpack.c.l.b16 %v410
        %v1565 = vunpack.c.l.b16 %v411
        %v1566 = vunpack.c.l.b16 %v412
        %v1567 = vpack.c.b16 %v1551, %v1551
        %v1568 = vpack.c.b16 %v1552, %v1552
        %v1569 = vpack.c.b16 %v1553, %v1553
        %v1570 = vpack.c.b16 %v1554, %v1554
        %v1571 = vpack.c.b16 %v1555, %v1555
        %v1572 = vpack.c.b16 %v1556, %v1556
        %v1573 = vpack.c.b16 %v1557, %v1557
        %v1574 = vpack.c.b16 %v1558, %v1558
        %v1575 = vpack.c.b16 %v1559, %v1559
        %v1576 = vpack.c.b16 %v1560, %v1560
        %v1577 = vpack.c.b16 %v1561, %v1561
        %v1578 = vpack.c.b16 %v1562, %v1562
        %v1579 = vpack.c.b16 %v1563, %v1563
        %v1580 = vpack.c.b16 %v1564, %v1564
        %v1581 = vpack.c.b16 %v1565, %v1565
        %v1582 = vpack.c.b16 %v1566, %v1566
        %v1584 = vshrl.u32 %v1487, 16
        %v1586 = vshll.u32 %v1487, 16
        %v1588 = vrot.slane %v1586, 1
        %v1589 = vor.u32 %v1584, %v1588
        %v1591 = vshll.u32 %v1567, 16
        %v1593 = vrot.slane %v1591, 1
        %v1594 = vsel %vm557, %v1589, %v1593
        %v1596 = vshrl.u32 %v1488, 16
        %v1598 = vshll.u32 %v1488, 16
        %v1600 = vrot.slane %v1598, 1
        %v1601 = vor.u32 %v1596, %v1600
        %v1603 = vshll.u32 %v1568, 16
        %v1605 = vrot.slane %v1603, 1
        %v1606 = vsel %vm557, %v1601, %v1605
        %v1608 = vshrl.u32 %v1489, 16
        %v1610 = vshll.u32 %v1489, 16
        %v1612 = vrot.slane %v1610, 1
        %v1613 = vor.u32 %v1608, %v1612
        %v1615 = vshll.u32 %v1569, 16
        %v1617 = vrot.slane %v1615, 1
        %v1618 = vsel %vm557, %v1613, %v1617
        %v1620 = vshrl.u32 %v1490, 16
        %v1622 = vshll.u32 %v1490, 16
        %v1624 = vrot.slane %v1622, 1
        %v1625 = vor.u32 %v1620, %v1624
        %v1627 = vshll.u32 %v1570, 16
        %v1629 = vrot.slane %v1627, 1
        %v1630 = vsel %vm557, %v1625, %v1629
        %v1632 = vshrl.u32 %v1491, 16
        %v1634 = vshll.u32 %v1491, 16
        %v1636 = vrot.slane %v1634, 1
        %v1637 = vor.u32 %v1632, %v1636
        %v1639 = vshll.u32 %v1571, 16
        %v1641 = vrot.slane %v1639, 1
        %v1642 = vsel %vm557, %v1637, %v1641
        %v1644 = vshrl.u32 %v1492, 16
        %v1646 = vshll.u32 %v1492, 16
        %v1648 = vrot.slane %v1646, 1
        %v1649 = vor.u32 %v1644, %v1648
        %v1651 = vshll.u32 %v1572, 16
        %v1653 = vrot.slane %v1651, 1
        %v1654 = vsel %vm557, %v1649, %v1653
        %v1656 = vshrl.u32 %v1493, 16
        %v1658 = vshll.u32 %v1493, 16
        %v1660 = vrot.slane %v1658, 1
        %v1661 = vor.u32 %v1656, %v1660
        %v1663 = vshll.u32 %v1573, 16
        %v1665 = vrot.slane %v1663, 1
        %v1666 = vsel %vm557, %v1661, %v1665
        %v1668 = vshrl.u32 %v1494, 16
        %v1670 = vshll.u32 %v1494, 16
        %v1672 = vrot.slane %v1670, 1
        %v1673 = vor.u32 %v1668, %v1672
        %v1675 = vshll.u32 %v1574, 16
        %v1677 = vrot.slane %v1675, 1
        %v1678 = vsel %vm557, %v1673, %v1677
        %v1680 = vshrl.u32 %v1495, 16
        %v1682 = vshll.u32 %v1495, 16
        %v1684 = vrot.slane %v1682, 1
        %v1685 = vor.u32 %v1680, %v1684
        %v1687 = vshll.u32 %v1575, 16
        %v1689 = vrot.slane %v1687, 1
        %v1690 = vsel %vm557, %v1685, %v1689
        %v1692 = vshrl.u32 %v1496, 16
        %v1694 = vshll.u32 %v1496, 16
        %v1696 = vrot.slane %v1694, 1
        %v1697 = vor.u32 %v1692, %v1696
        %v1699 = vshll.u32 %v1576, 16
        %v1701 = vrot.slane %v1699, 1
        %v1702 = vsel %vm557, %v1697, %v1701
        %v1704 = vshrl.u32 %v1497, 16
        %v1706 = vshll.u32 %v1497, 16
        %v1708 = vrot.slane %v1706, 1
        %v1709 = vor.u32 %v1704, %v1708
        %v1711 = vshll.u32 %v1577, 16
        %v1713 = vrot.slane %v1711, 1
        %v1714 = vsel %vm557, %v1709, %v1713
        %v1716 = vshrl.u32 %v1498, 16
        %v1718 = vshll.u32 %v1498, 16
        %v1720 = vrot.slane %v1718, 1
        %v1721 = vor.u32 %v1716, %v1720
        %v1723 = vshll.u32 %v1578, 16
        %v1725 = vrot.slane %v1723, 1
        %v1726 = vsel %vm557, %v1721, %v1725
        %v1728 = vshrl.u32 %v1499, 16
        %v1730 = vshll.u32 %v1499, 16
        %v1732 = vrot.slane %v1730, 1
        %v1733 = vor.u32 %v1728, %v1732
        %v1735 = vshll.u32 %v1579, 16
        %v1737 = vrot.slane %v1735, 1
        %v1738 = vsel %vm557, %v1733, %v1737
        %v1740 = vshrl.u32 %v1500, 16
        %v1742 = vshll.u32 %v1500, 16
        %v1744 = vrot.slane %v1742, 1
        %v1745 = vor.u32 %v1740, %v1744
        %v1747 = vshll.u32 %v1580, 16
        %v1749 = vrot.slane %v1747, 1
        %v1750 = vsel %vm557, %v1745, %v1749
        %v1752 = vshrl.u32 %v1501, 16
        %v1754 = vshll.u32 %v1501, 16
        %v1756 = vrot.slane %v1754, 1
        %v1757 = vor.u32 %v1752, %v1756
        %v1759 = vshll.u32 %v1581, 16
        %v1761 = vrot.slane %v1759, 1
        %v1762 = vsel %vm557, %v1757, %v1761
        %v1764 = vshrl.u32 %v1502, 16
        %v1766 = vshll.u32 %v1502, 16
        %v1768 = vrot.slane %v1766, 1
        %v1769 = vor.u32 %v1764, %v1768
        %v1771 = vshll.u32 %v1582, 16
        %v1773 = vrot.slane %v1771, 1
        %v1774 = vsel %vm557, %v1769, %v1773
        %1775 = vrot.lane.b32.xlu0 %v1594, 28
        %v1776 = vpop.permute.xlu0 %1775
        %1777 = vrot.lane.b32.xlu0 %v1606, 28
        %v1778 = vpop.permute.xlu0 %1777
        %1779 = vrot.lane.b32.xlu0 %v1618, 28
        %v1780 = vpop.permute.xlu0 %1779
        %1781 = vrot.lane.b32.xlu0 %v1630, 28
        %v1782 = vpop.permute.xlu0 %1781
        %1783 = vrot.lane.b32.xlu0 %v1642, 28
        %v1784 = vpop.permute.xlu0 %1783
        %1785 = vrot.lane.b32.xlu0 %v1654, 28
        %v1786 = vpop.permute.xlu0 %1785
        %1787 = vrot.lane.b32.xlu0 %v1666, 28
        %v1788 = vpop.permute.xlu0 %1787
        %1789 = vrot.lane.b32.xlu0 %v1678, 28
        %v1790 = vpop.permute.xlu0 %1789
        %1791 = vrot.lane.b32.xlu0 %v1690, 28
        %v1792 = vpop.permute.xlu0 %1791
        %1793 = vrot.lane.b32.xlu0 %v1702, 28
        %v1794 = vpop.permute.xlu0 %1793
        %1795 = vrot.lane.b32.xlu0 %v1714, 28
        %v1796 = vpop.permute.xlu0 %1795
        %1797 = vrot.lane.b32.xlu0 %v1726, 28
        %v1798 = vpop.permute.xlu0 %1797
        %1799 = vrot.lane.b32.xlu0 %v1738, 28
        %v1800 = vpop.permute.xlu0 %1799
        %1801 = vrot.lane.b32.xlu0 %v1750, 28
        %v1802 = vpop.permute.xlu0 %1801
        %1803 = vrot.lane.b32.xlu0 %v1762, 28
        %v1804 = vpop.permute.xlu0 %1803
        %1805 = vrot.lane.b32.xlu0 %v1774, 28
        %v1806 = vpop.permute.xlu0 %1805
        %v1823 = vunpack.c.l.b16 %v413
        %v1824 = vunpack.c.l.b16 %v414
        %v1825 = vunpack.c.l.b16 %v415
        %v1826 = vunpack.c.l.b16 %v416
        %v1827 = vunpack.c.l.b16 %v417
        %v1828 = vunpack.c.l.b16 %v418
        %v1829 = vunpack.c.l.b16 %v419
        %v1830 = vunpack.c.l.b16 %v420
        %v1831 = vunpack.c.l.b16 %v421
        %v1832 = vunpack.c.l.b16 %v422
        %v1833 = vunpack.c.l.b16 %v423
        %v1834 = vunpack.c.l.b16 %v424
        %v1835 = vunpack.c.l.b16 %v425
        %v1836 = vunpack.c.l.b16 %v426
        %v1837 = vunpack.c.l.b16 %v427
        %v1838 = vunpack.c.l.b16 %v428
        %v1839 = vpack.c.b16 %v1456, %v1823
        %v1840 = vpack.c.b16 %v1458, %v1824
        %v1841 = vpack.c.b16 %v1460, %v1825
        %v1842 = vpack.c.b16 %v1462, %v1826
        %v1843 = vpack.c.b16 %v1464, %v1827
        %v1844 = vpack.c.b16 %v1466, %v1828
        %v1845 = vpack.c.b16 %v1468, %v1829
        %v1846 = vpack.c.b16 %v1470, %v1830
        %v1847 = vpack.c.b16 %v1472, %v1831
        %v1848 = vpack.c.b16 %v1474, %v1832
        %v1849 = vpack.c.b16 %v1476, %v1833
        %v1850 = vpack.c.b16 %v1478, %v1834
        %v1851 = vpack.c.b16 %v1480, %v1835
        %v1852 = vpack.c.b16 %v1482, %v1836
        %v1853 = vpack.c.b16 %v1484, %v1837
        %v1854 = vpack.c.b16 %v1486, %v1838
        %v1855 = vrot.slane %v1839, 1
        %v1856 = vrot.slane %v1567, 1
        %v1857 = vsel %vm830, %v1855, %v1856
        %v1858 = vrot.slane %v1840, 1
        %v1859 = vrot.slane %v1568, 1
        %v1860 = vsel %vm830, %v1858, %v1859
        %v1861 = vrot.slane %v1841, 1
        %v1862 = vrot.slane %v1569, 1
        %v1863 = vsel %vm830, %v1861, %v1862
        %v1864 = vrot.slane %v1842, 1
        %v1865 = vrot.slane %v1570, 1
        %v1866 = vsel %vm830, %v1864, %v1865
        %v1867 = vrot.slane %v1843, 1
        %v1868 = vrot.slane %v1571, 1
        %v1869 = vsel %vm830, %v1867, %v1868
        %v1870 = vrot.slane %v1844, 1
        %v1871 = vrot.slane %v1572, 1
        %v1872 = vsel %vm830, %v1870, %v1871
        %v1873 = vrot.slane %v1845, 1
        %v1874 = vrot.slane %v1573, 1
        %v1875 = vsel %vm830, %v1873, %v1874
        %v1876 = vrot.slane %v1846, 1
        %v1877 = vrot.slane %v1574, 1
        %v1878 = vsel %vm830, %v1876, %v1877
        %v1879 = vrot.slane %v1847, 1
        %v1880 = vrot.slane %v1575, 1
        %v1881 = vsel %vm830, %v1879, %v1880
        %v1882 = vrot.slane %v1848, 1
        %v1883 = vrot.slane %v1576, 1
        %v1884 = vsel %vm830, %v1882, %v1883
        %v1885 = vrot.slane %v1849, 1
        %v1886 = vrot.slane %v1577, 1
        %v1887 = vsel %vm830, %v1885, %v1886
        %v1888 = vrot.slane %v1850, 1
        %v1889 = vrot.slane %v1578, 1
        %v1890 = vsel %vm830, %v1888, %v1889
        %v1891 = vrot.slane %v1851, 1
        %v1892 = vrot.slane %v1579, 1
        %v1893 = vsel %vm830, %v1891, %v1892
        %v1894 = vrot.slane %v1852, 1
        %v1895 = vrot.slane %v1580, 1
        %v1896 = vsel %vm830, %v1894, %v1895
        %v1897 = vrot.slane %v1853, 1
        %v1898 = vrot.slane %v1581, 1
        %v1899 = vsel %vm830, %v1897, %v1898
        %v1900 = vrot.slane %v1854, 1
        %v1901 = vrot.slane %v1582, 1
        %v1902 = vsel %vm830, %v1900, %v1901
        %1903 = vrot.lane.b32.xlu0 %v1857, 32
        %v1904 = vpop.permute.xlu0 %1903
        %1905 = vrot.lane.b32.xlu0 %v1860, 32
        %v1906 = vpop.permute.xlu0 %1905
        %1907 = vrot.lane.b32.xlu0 %v1863, 32
        %v1908 = vpop.permute.xlu0 %1907
        %1909 = vrot.lane.b32.xlu0 %v1866, 32
        %v1910 = vpop.permute.xlu0 %1909
        %1911 = vrot.lane.b32.xlu0 %v1869, 32
        %v1912 = vpop.permute.xlu0 %1911
        %1913 = vrot.lane.b32.xlu0 %v1872, 32
        %v1914 = vpop.permute.xlu0 %1913
        %1915 = vrot.lane.b32.xlu0 %v1875, 32
        %v1916 = vpop.permute.xlu0 %1915
        %1917 = vrot.lane.b32.xlu0 %v1878, 32
        %v1918 = vpop.permute.xlu0 %1917
        %1919 = vrot.lane.b32.xlu0 %v1881, 32
        %v1920 = vpop.permute.xlu0 %1919
        %1921 = vrot.lane.b32.xlu0 %v1884, 32
        %v1922 = vpop.permute.xlu0 %1921
        %1923 = vrot.lane.b32.xlu0 %v1887, 32
        %v1924 = vpop.permute.xlu0 %1923
        %1925 = vrot.lane.b32.xlu0 %v1890, 32
        %v1926 = vpop.permute.xlu0 %1925
        %1927 = vrot.lane.b32.xlu0 %v1893, 32
        %v1928 = vpop.permute.xlu0 %1927
        %1929 = vrot.lane.b32.xlu0 %v1896, 32
        %v1930 = vpop.permute.xlu0 %1929
        %1931 = vrot.lane.b32.xlu0 %v1899, 32
        %v1932 = vpop.permute.xlu0 %1931
        %1933 = vrot.lane.b32.xlu0 %v1902, 32
        %v1934 = vpop.permute.xlu0 %1933
        %vm1935 = vcmask 31744
        %v1937 = vsel %vm1935, %v493, %v751
        %v1939 = vsel %vm1935, %v494, %v753
        %v1941 = vsel %vm1935, %v495, %v755
        %v1943 = vsel %vm1935, %v496, %v757
        %v1945 = vsel %vm1935, %v497, %v759
        %v1947 = vsel %vm1935, %v498, %v761
        %v1949 = vsel %vm1935, %v499, %v763
        %v1951 = vsel %vm1935, %v500, %v765
        %v1953 = vsel %vm1935, %v501, %v767
        %v1955 = vsel %vm1935, %v502, %v769
        %v1957 = vsel %vm1935, %v503, %v771
        %v1959 = vsel %vm1935, %v504, %v773
        %v1961 = vsel %vm1935, %v505, %v775
        %v1963 = vsel %vm1935, %v506, %v777
        %v1965 = vsel %vm1935, %v507, %v779
        %v1967 = vsel %vm1935, %v508, %v781
        %vm1968 = vcmask 64512
        %v1970 = vsel %vm1968, %v1937, %v880
        %v1972 = vsel %vm1968, %v1939, %v882
        %v1974 = vsel %vm1968, %v1941, %v884
        %v1976 = vsel %vm1968, %v1943, %v886
        %v1978 = vsel %vm1968, %v1945, %v888
        %v1980 = vsel %vm1968, %v1947, %v890
        %v1982 = vsel %vm1968, %v1949, %v892
        %v1984 = vsel %vm1968, %v1951, %v894
        %v1986 = vsel %vm1968, %v1953, %v896
        %v1988 = vsel %vm1968, %v1955, %v898
        %v1990 = vsel %vm1968, %v1957, %v900
        %v1992 = vsel %vm1968, %v1959, %v902
        %v1994 = vsel %vm1968, %v1961, %v904
        %v1996 = vsel %vm1968, %v1963, %v906
        %v1998 = vsel %vm1968, %v1965, %v908
        %v2000 = vsel %vm1968, %v1967, %v910
        %vm2001 = vcmask 97280
        %v2003 = vsel %vm2001, %v1970, %v992
        %v2005 = vsel %vm2001, %v1972, %v994
        %v2007 = vsel %vm2001, %v1974, %v996
        %v2009 = vsel %vm2001, %v1976, %v998
        %v2011 = vsel %vm2001, %v1978, %v1000
        %v2013 = vsel %vm2001, %v1980, %v1002
        %v2015 = vsel %vm2001, %v1982, %v1004
        %v2017 = vsel %vm2001, %v1984, %v1006
        %v2019 = vsel %vm2001, %v1986, %v1008
        %v2021 = vsel %vm2001, %v1988, %v1010
        %v2023 = vsel %vm2001, %v1990, %v1012
        %v2025 = vsel %vm2001, %v1992, %v1014
        %v2027 = vsel %vm2001, %v1994, %v1016
        %v2029 = vsel %vm2001, %v1996, %v1018
        %v2031 = vsel %vm2001, %v1998, %v1020
        %v2033 = vsel %vm2001, %v2000, %v1022
        %vm2034 = vcmask 130048
        %v2036 = vsel %vm2034, %v2003, %v1264
        %v2038 = vsel %vm2034, %v2005, %v1266
        %v2040 = vsel %vm2034, %v2007, %v1268
        %v2042 = vsel %vm2034, %v2009, %v1270
        %v2044 = vsel %vm2034, %v2011, %v1272
        %v2046 = vsel %vm2034, %v2013, %v1274
        %v2048 = vsel %vm2034, %v2015, %v1276
        %v2050 = vsel %vm2034, %v2017, %v1278
        %v2052 = vsel %vm2034, %v2019, %v1280
        %v2054 = vsel %vm2034, %v2021, %v1282
        %v2056 = vsel %vm2034, %v2023, %v1284
        %v2058 = vsel %vm2034, %v2025, %v1286
        %v2060 = vsel %vm2034, %v2027, %v1288
        %v2062 = vsel %vm2034, %v2029, %v1290
        %v2064 = vsel %vm2034, %v2031, %v1292
        %v2066 = vsel %vm2034, %v2033, %v1294
        %vm2067 = vcmask 162816
        %v2069 = vsel %vm2067, %v2036, %v1392
        %v2071 = vsel %vm2067, %v2038, %v1394
        %v2073 = vsel %vm2067, %v2040, %v1396
        %v2075 = vsel %vm2067, %v2042, %v1398
        %v2077 = vsel %vm2067, %v2044, %v1400
        %v2079 = vsel %vm2067, %v2046, %v1402
        %v2081 = vsel %vm2067, %v2048, %v1404
        %v2083 = vsel %vm2067, %v2050, %v1406
        %v2085 = vsel %vm2067, %v2052, %v1408
        %v2087 = vsel %vm2067, %v2054, %v1410
        %v2089 = vsel %vm2067, %v2056, %v1412
        %v2091 = vsel %vm2067, %v2058, %v1414
        %v2093 = vsel %vm2067, %v2060, %v1416
        %v2095 = vsel %vm2067, %v2062, %v1418
        %v2097 = vsel %vm2067, %v2064, %v1420
        %v2099 = vsel %vm2067, %v2066, %v1422
        %vm2100 = vcmask 195584
        %v2102 = vsel %vm2100, %v2069, %v1504
        %v2104 = vsel %vm2100, %v2071, %v1506
        %v2106 = vsel %vm2100, %v2073, %v1508
        %v2108 = vsel %vm2100, %v2075, %v1510
        %v2110 = vsel %vm2100, %v2077, %v1512
        %v2112 = vsel %vm2100, %v2079, %v1514
        %v2114 = vsel %vm2100, %v2081, %v1516
        %v2116 = vsel %vm2100, %v2083, %v1518
        %v2118 = vsel %vm2100, %v2085, %v1520
        %v2120 = vsel %vm2100, %v2087, %v1522
        %v2122 = vsel %vm2100, %v2089, %v1524
        %v2124 = vsel %vm2100, %v2091, %v1526
        %v2126 = vsel %vm2100, %v2093, %v1528
        %v2128 = vsel %vm2100, %v2095, %v1530
        %v2130 = vsel %vm2100, %v2097, %v1532
        %v2132 = vsel %vm2100, %v2099, %v1534
        %vm2133 = vcmask 228352
        %v2135 = vsel %vm2133, %v2102, %v1776
        %v2137 = vsel %vm2133, %v2104, %v1778
        %v2139 = vsel %vm2133, %v2106, %v1780
        %v2141 = vsel %vm2133, %v2108, %v1782
        %v2143 = vsel %vm2133, %v2110, %v1784
        %v2145 = vsel %vm2133, %v2112, %v1786
        %v2147 = vsel %vm2133, %v2114, %v1788
        %v2149 = vsel %vm2133, %v2116, %v1790
        %v2151 = vsel %vm2133, %v2118, %v1792
        %v2153 = vsel %vm2133, %v2120, %v1794
        %v2155 = vsel %vm2133, %v2122, %v1796
        %v2157 = vsel %vm2133, %v2124, %v1798
        %v2159 = vsel %vm2133, %v2126, %v1800
        %v2161 = vsel %vm2133, %v2128, %v1802
        %v2163 = vsel %vm2133, %v2130, %v1804
        %v2165 = vsel %vm2133, %v2132, %v1806
        %vm2166 = vcmask 261120
        %v2168 = vsel %vm2166, %v2135, %v1904
        %v2170 = vsel %vm2166, %v2137, %v1906
        %v2172 = vsel %vm2166, %v2139, %v1908
        %v2174 = vsel %vm2166, %v2141, %v1910
        %v2176 = vsel %vm2166, %v2143, %v1912
        %v2178 = vsel %vm2166, %v2145, %v1914
        %v2180 = vsel %vm2166, %v2147, %v1916
        %v2182 = vsel %vm2166, %v2149, %v1918
        %v2184 = vsel %vm2166, %v2151, %v1920
        %v2186 = vsel %vm2166, %v2153, %v1922
        %v2188 = vsel %vm2166, %v2155, %v1924
        %v2190 = vsel %vm2166, %v2157, %v1926
        %v2192 = vsel %vm2166, %v2159, %v1928
        %v2194 = vsel %vm2166, %v2161, %v1930
        %v2196 = vsel %vm2166, %v2163, %v1932
        %v2198 = vsel %vm2166, %v2165, %v1934
        %v2199 = vld [vmem:[%s219] sm:$0xf]
        %v2200 = vld [vmem:[%s219 + $0x4] sm:$0xf]
        %v2201 = vld [vmem:[%s219 + $0x8] sm:$0xf]
        %v2202 = vld [vmem:[%s219 + $0xc] sm:$0xf]
        %v2203 = vld [vmem:[%s219 + $0x10] sm:$0x3]
        %v2204 = vld [vmem:[%s222] sm:$0x1]
        %v2206 = vperm.slane %v2204, 0
        %v2213 = vunpack.c.l.b16 %v2199
        %v2214 = vunpack.c.l.b16 %v2200
        %v2215 = vunpack.c.l.b16 %v2201
        %v2216 = vunpack.c.l.b16 %v2202
        %v2217 = vunpack.c.l.b16 %v2203
        %v2218 = vpack.c.b16 %v2214, %v2213
        %v2219 = vpack.c.b16 %v2216, %v2215
        %v2220 = vpack.c.b16 %v2217, %v2217
        %vm2223 = vcmask 293888
        %v2224 = vsel %vm2223, %v2168, 0
        %v2226 = vsel %vm2223, %v2170, 0
        %v2228 = vsel %vm2223, %v2172, 0
        %v2230 = vsel %vm2223, %v2174, 0
        %v2232 = vsel %vm2223, %v2176, 0
        %v2234 = vsel %vm2223, %v2178, 0
        %v2236 = vsel %vm2223, %v2180, 0
        %v2238 = vsel %vm2223, %v2182, 0
        %v2240 = vsel %vm2223, %v2184, 0
        %v2242 = vsel %vm2223, %v2186, 0
        %v2244 = vsel %vm2223, %v2188, 0
        %v2246 = vsel %vm2223, %v2190, 0
        %v2248 = vsel %vm2223, %v2192, 0
        %v2250 = vsel %vm2223, %v2194, 0
        %v2252 = vsel %vm2223, %v2196, 0
        %v2254 = vsel %vm2223, %v2198, 0
        %vm2256 = vcmask 1041408
        %v2258 = vsel %vm2256, %v2220, 0
        %2260 = vmatpush.bf16.msra.mxu0 0
        %2261 = vmatpush.bf16.msra.mxu0 0
        %2262 = vmatpush.bf16.msra.mxu0 0
        %2263 = vmatpush.bf16.msra.mxu0 0
        %2264 = vmatpush.bf16.msra.mxu0 0
        %2265 = vmatpush.bf16.msra.mxu0 %v2258
        %2266 = vmatpush.bf16.msra.mxu0 %v2219
        %2267 = vmatpush.bf16.msra.mxu0 %v2218
        %2268 = vmatmul.bf16.gmra.mxu0 %v2224
        %v2269 = vpop.f32.mrf.mxu0
        %v2270 = vadd.f32 %v2206, %v2269
        %v2271 = vpop.f32.mrf.mxu0
        %v2272 = vadd.f32 %v2206, %v2271
        %2273 = vmatmul.bf16.gmra.mxu0 %v2226
        %v2274 = vpop.f32.mrf.mxu0
        %v2275 = vadd.f32 %v2206, %v2274
        %v2276 = vpop.f32.mrf.mxu0
        %v2277 = vadd.f32 %v2206, %v2276
        %2278 = vmatmul.bf16.gmra.mxu0 %v2228
        %v2279 = vpop.f32.mrf.mxu0
        %v2280 = vadd.f32 %v2206, %v2279
        %v2281 = vpop.f32.mrf.mxu0
        %v2282 = vadd.f32 %v2206, %v2281
        %2283 = vmatmul.bf16.gmra.mxu0 %v2230
        %v2284 = vpop.f32.mrf.mxu0
        %v2285 = vadd.f32 %v2206, %v2284
        %v2286 = vpop.f32.mrf.mxu0
        %v2287 = vadd.f32 %v2206, %v2286
        %2288 = vmatmul.bf16.gmra.mxu0 %v2232
        %v2289 = vpop.f32.mrf.mxu0
        %v2290 = vadd.f32 %v2206, %v2289
        %v2291 = vpop.f32.mrf.mxu0
        %v2292 = vadd.f32 %v2206, %v2291
        %2293 = vmatmul.bf16.gmra.mxu0 %v2234
        %v2294 = vpop.f32.mrf.mxu0
        %v2295 = vadd.f32 %v2206, %v2294
        %v2296 = vpop.f32.mrf.mxu0
        %v2297 = vadd.f32 %v2206, %v2296
        %2298 = vmatmul.bf16.gmra.mxu0 %v2236
        %v2299 = vpop.f32.mrf.mxu0
        %v2300 = vadd.f32 %v2206, %v2299
        %v2301 = vpop.f32.mrf.mxu0
        %v2302 = vadd.f32 %v2206, %v2301
        %2303 = vmatmul.bf16.gmra.mxu0 %v2238
        %v2304 = vpop.f32.mrf.mxu0
        %v2305 = vadd.f32 %v2206, %v2304
        %v2306 = vpop.f32.mrf.mxu0
        %v2307 = vadd.f32 %v2206, %v2306
        %2308 = vmatmul.bf16.gmra.mxu0 %v2240
        %v2309 = vpop.f32.mrf.mxu0
        %v2310 = vadd.f32 %v2206, %v2309
        %v2311 = vpop.f32.mrf.mxu0
        %v2312 = vadd.f32 %v2206, %v2311
        %2313 = vmatmul.bf16.gmra.mxu0 %v2242
        %v2314 = vpop.f32.mrf.mxu0
        %v2315 = vadd.f32 %v2206, %v2314
        %v2316 = vpop.f32.mrf.mxu0
        %v2317 = vadd.f32 %v2206, %v2316
        %2318 = vmatmul.bf16.gmra.mxu0 %v2244
        %v2319 = vpop.f32.mrf.mxu0
        %v2320 = vadd.f32 %v2206, %v2319
        %v2321 = vpop.f32.mrf.mxu0
        %v2322 = vadd.f32 %v2206, %v2321
        %2323 = vmatmul.bf16.gmra.mxu0 %v2246
        %v2324 = vpop.f32.mrf.mxu0
        %v2325 = vadd.f32 %v2206, %v2324
        %v2326 = vpop.f32.mrf.mxu0
        %v2327 = vadd.f32 %v2206, %v2326
        %2328 = vmatmul.bf16.gmra.mxu0 %v2248
        %v2329 = vpop.f32.mrf.mxu0
        %v2330 = vadd.f32 %v2206, %v2329
        %v2331 = vpop.f32.mrf.mxu0
        %v2332 = vadd.f32 %v2206, %v2331
        %2333 = vmatmul.bf16.gmra.mxu0 %v2250
        %v2334 = vpop.f32.mrf.mxu0
        %v2335 = vadd.f32 %v2206, %v2334
        %v2336 = vpop.f32.mrf.mxu0
        %v2337 = vadd.f32 %v2206, %v2336
        %2338 = vmatmul.bf16.gmra.mxu0 %v2252
        %v2339 = vpop.f32.mrf.mxu0
        %v2340 = vadd.f32 %v2206, %v2339
        %v2341 = vpop.f32.mrf.mxu0
        %v2342 = vadd.f32 %v2206, %v2341
        %2343 = vmatmul.bf16.gmra.mxu0 %v2254
        %v2344 = vpop.f32.mrf.mxu0
        %v2345 = vadd.f32 %v2206, %v2344
        %v2346 = vpop.f32.mrf.mxu0
        %v2347 = vadd.f32 %v2206, %v2346
        %2348 = vdwg.mxu0
        %v2349 = vxor.u32 %v2270, 2147483648
        %v2350 = vxor.u32 %v2272, 2147483648
        %v2351 = vxor.u32 %v2275, 2147483648
        %v2352 = vxor.u32 %v2277, 2147483648
        %v2353 = vxor.u32 %v2280, 2147483648
        %v2354 = vxor.u32 %v2282, 2147483648
        %v2355 = vxor.u32 %v2285, 2147483648
        %v2356 = vxor.u32 %v2287, 2147483648
        %v2357 = vxor.u32 %v2290, 2147483648
        %v2358 = vxor.u32 %v2292, 2147483648
        %v2359 = vxor.u32 %v2295, 2147483648
        %v2360 = vxor.u32 %v2297, 2147483648
        %v2361 = vxor.u32 %v2300, 2147483648
        %v2362 = vxor.u32 %v2302, 2147483648
        %v2363 = vxor.u32 %v2305, 2147483648
        %v2364 = vxor.u32 %v2307, 2147483648
        %v2365 = vxor.u32 %v2310, 2147483648
        %v2366 = vxor.u32 %v2312, 2147483648
        %v2367 = vxor.u32 %v2315, 2147483648
        %v2368 = vxor.u32 %v2317, 2147483648
        %v2369 = vxor.u32 %v2320, 2147483648
        %v2370 = vxor.u32 %v2322, 2147483648
        %v2371 = vxor.u32 %v2325, 2147483648
        %v2372 = vxor.u32 %v2327, 2147483648
        %v2373 = vxor.u32 %v2330, 2147483648
        %v2374 = vxor.u32 %v2332, 2147483648
        %v2375 = vxor.u32 %v2335, 2147483648
        %v2376 = vxor.u32 %v2337, 2147483648
        %v2377 = vxor.u32 %v2340, 2147483648
        %v2378 = vxor.u32 %v2342, 2147483648
        %v2379 = vxor.u32 %v2345, 2147483648
        %v2380 = vxor.u32 %v2347, 2147483648
        %v2381 = vmul.f32 %v2349, 1.442695
        %v2382 = vpow.pop %v2381
        %v2383 = vmul.f32 %v2350, 1.442695
        %v2384 = vpow.pop %v2383
        %v2385 = vmul.f32 %v2351, 1.442695
        %v2386 = vpow.pop %v2385
        %v2387 = vmul.f32 %v2352, 1.442695
        %v2388 = vpow.pop %v2387
        %v2389 = vmul.f32 %v2353, 1.442695
        %v2390 = vpow.pop %v2389
        %v2391 = vmul.f32 %v2354, 1.442695
        %v2392 = vpow.pop %v2391
        %v2393 = vmul.f32 %v2355, 1.442695
        %v2394 = vpow.pop %v2393
        %v2395 = vmul.f32 %v2356, 1.442695
        %v2396 = vpow.pop %v2395
        %v2397 = vmul.f32 %v2357, 1.442695
        %v2398 = vpow.pop %v2397
        %v2399 = vmul.f32 %v2358, 1.442695
        %v2400 = vpow.pop %v2399
        %v2401 = vmul.f32 %v2359, 1.442695
        %v2402 = vpow.pop %v2401
        %v2403 = vmul.f32 %v2360, 1.442695
        %v2404 = vpow.pop %v2403
        %v2405 = vmul.f32 %v2361, 1.442695
        %v2406 = vpow.pop %v2405
        %v2407 = vmul.f32 %v2362, 1.442695
        %v2408 = vpow.pop %v2407
        %v2409 = vmul.f32 %v2363, 1.442695
        %v2410 = vpow.pop %v2409
        %v2411 = vmul.f32 %v2364, 1.442695
        %v2412 = vpow.pop %v2411
        %v2413 = vmul.f32 %v2365, 1.442695
        %v2414 = vpow.pop %v2413
        %v2415 = vmul.f32 %v2366, 1.442695
        %v2416 = vpow.pop %v2415
        %v2417 = vmul.f32 %v2367, 1.442695
        %v2418 = vpow.pop %v2417
        %v2419 = vmul.f32 %v2368, 1.442695
        %v2420 = vpow.pop %v2419
        %v2421 = vmul.f32 %v2369, 1.442695
        %v2422 = vpow.pop %v2421
        %v2423 = vmul.f32 %v2370, 1.442695
        %v2424 = vpow.pop %v2423
        %v2425 = vmul.f32 %v2371, 1.442695
        %v2426 = vpow.pop %v2425
        %v2427 = vmul.f32 %v2372, 1.442695
        %v2428 = vpow.pop %v2427
        %v2429 = vmul.f32 %v2373, 1.442695
        %v2430 = vpow.pop %v2429
        %v2431 = vmul.f32 %v2374, 1.442695
        %v2432 = vpow.pop %v2431
        %v2433 = vmul.f32 %v2375, 1.442695
        %v2434 = vpow.pop %v2433
        %v2435 = vmul.f32 %v2376, 1.442695
        %v2436 = vpow.pop %v2435
        %v2437 = vmul.f32 %v2377, 1.442695
        %v2438 = vpow.pop %v2437
        %v2439 = vmul.f32 %v2378, 1.442695
        %v2440 = vpow.pop %v2439
        %v2441 = vmul.f32 %v2379, 1.442695
        %v2442 = vpow.pop %v2441
        %v2443 = vmul.f32 %v2380, 1.442695
        %v2444 = vpow.pop %v2443
        %v2445 = vadd.f32 %v2382, 1.0
        %v2446 = vadd.f32 %v2384, 1.0
        %v2447 = vadd.f32 %v2386, 1.0
        %v2448 = vadd.f32 %v2388, 1.0
        %v2449 = vadd.f32 %v2390, 1.0
        %v2450 = vadd.f32 %v2392, 1.0
        %v2451 = vadd.f32 %v2394, 1.0
        %v2452 = vadd.f32 %v2396, 1.0
        %v2453 = vadd.f32 %v2398, 1.0
        %v2454 = vadd.f32 %v2400, 1.0
        %v2455 = vadd.f32 %v2402, 1.0
        %v2456 = vadd.f32 %v2404, 1.0
        %v2457 = vadd.f32 %v2406, 1.0
        %v2458 = vadd.f32 %v2408, 1.0
        %v2459 = vadd.f32 %v2410, 1.0
        %v2460 = vadd.f32 %v2412, 1.0
        %v2461 = vadd.f32 %v2414, 1.0
        %v2462 = vadd.f32 %v2416, 1.0
        %v2463 = vadd.f32 %v2418, 1.0
        %v2464 = vadd.f32 %v2420, 1.0
        %v2465 = vadd.f32 %v2422, 1.0
        %v2466 = vadd.f32 %v2424, 1.0
        %v2467 = vadd.f32 %v2426, 1.0
        %v2468 = vadd.f32 %v2428, 1.0
        %v2469 = vadd.f32 %v2430, 1.0
        %v2470 = vadd.f32 %v2432, 1.0
        %v2471 = vadd.f32 %v2434, 1.0
        %v2472 = vadd.f32 %v2436, 1.0
        %v2473 = vadd.f32 %v2438, 1.0
        %v2474 = vadd.f32 %v2440, 1.0
        %v2475 = vadd.f32 %v2442, 1.0
        %v2476 = vadd.f32 %v2444, 1.0
        %v2477 = vrcp.pop %v2445
        %v2478 = vmul.f32 %v2445, %v2477
        %v2479 = vsub.f32 1.0, %v2478
        %v2480 = vmul.f32 %v2477, %v2479
        %v2481 = vadd.f32 %v2477, %v2480
        %vm2482 = vweird.f32 %v2445
        %vm2483 = vweird.f32 %v2477
        %vm2484 = vmor %vm2482, %vm2483
        %v2485 = vsel %vm2484, %v2477, %v2481
        %v2486 = vand.u32 2147483647, %v2445
        %vm2487 = vcmp.eq.f32.partialorder %v2486, 8.507059e+37
        %v2488 = vand.u32 %v2445, 2147483648
        %v2489 = vor.u32 1.1754944e-38, %v2488
        %v2490 = vsel %vm2487, %v2489, %v2485
        %v2491 = vmul.f32 1.0, %v2490
        %v2492 = vrcp.pop %v2446
        %v2493 = vmul.f32 %v2446, %v2492
        %v2494 = vsub.f32 1.0, %v2493
        %v2495 = vmul.f32 %v2492, %v2494
        %v2496 = vadd.f32 %v2492, %v2495
        %vm2497 = vweird.f32 %v2446
        %vm2498 = vweird.f32 %v2492
        %vm2499 = vmor %vm2497, %vm2498
        %v2500 = vsel %vm2499, %v2492, %v2496
        %v2501 = vand.u32 2147483647, %v2446
        %vm2502 = vcmp.eq.f32.partialorder %v2501, 8.507059e+37
        %v2503 = vand.u32 %v2446, 2147483648
        %v2504 = vor.u32 1.1754944e-38, %v2503
        %v2505 = vsel %vm2502, %v2504, %v2500
        %v2506 = vmul.f32 1.0, %v2505
        %v2507 = vrcp.pop %v2447
        %v2508 = vmul.f32 %v2447, %v2507
        %v2509 = vsub.f32 1.0, %v2508
        %v2510 = vmul.f32 %v2507, %v2509
        %v2511 = vadd.f32 %v2507, %v2510
        %vm2512 = vweird.f32 %v2447
        %vm2513 = vweird.f32 %v2507
        %vm2514 = vmor %vm2512, %vm2513
        %v2515 = vsel %vm2514, %v2507, %v2511
        %v2516 = vand.u32 2147483647, %v2447
        %vm2517 = vcmp.eq.f32.partialorder %v2516, 8.507059e+37
        %v2518 = vand.u32 %v2447, 2147483648
        %v2519 = vor.u32 1.1754944e-38, %v2518
        %v2520 = vsel %vm2517, %v2519, %v2515
        %v2521 = vmul.f32 1.0, %v2520
        %v2522 = vrcp.pop %v2448
        %v2523 = vmul.f32 %v2448, %v2522
        %v2524 = vsub.f32 1.0, %v2523
        %v2525 = vmul.f32 %v2522, %v2524
        %v2526 = vadd.f32 %v2522, %v2525
        %vm2527 = vweird.f32 %v2448
        %vm2528 = vweird.f32 %v2522
        %vm2529 = vmor %vm2527, %vm2528
        %v2530 = vsel %vm2529, %v2522, %v2526
        %v2531 = vand.u32 2147483647, %v2448
        %vm2532 = vcmp.eq.f32.partialorder %v2531, 8.507059e+37
        %v2533 = vand.u32 %v2448, 2147483648
        %v2534 = vor.u32 1.1754944e-38, %v2533
        %v2535 = vsel %vm2532, %v2534, %v2530
        %v2536 = vmul.f32 1.0, %v2535
        %v2537 = vrcp.pop %v2449
        %v2538 = vmul.f32 %v2449, %v2537
        %v2539 = vsub.f32 1.0, %v2538
        %v2540 = vmul.f32 %v2537, %v2539
        %v2541 = vadd.f32 %v2537, %v2540
        %vm2542 = vweird.f32 %v2449
        %vm2543 = vweird.f32 %v2537
        %vm2544 = vmor %vm2542, %vm2543
        %v2545 = vsel %vm2544, %v2537, %v2541
        %v2546 = vand.u32 2147483647, %v2449
        %vm2547 = vcmp.eq.f32.partialorder %v2546, 8.507059e+37
        %v2548 = vand.u32 %v2449, 2147483648
        %v2549 = vor.u32 1.1754944e-38, %v2548
        %v2550 = vsel %vm2547, %v2549, %v2545
        %v2551 = vmul.f32 1.0, %v2550
        %v2552 = vrcp.pop %v2450
        %v2553 = vmul.f32 %v2450, %v2552
        %v2554 = vsub.f32 1.0, %v2553
        %v2555 = vmul.f32 %v2552, %v2554
        %v2556 = vadd.f32 %v2552, %v2555
        %vm2557 = vweird.f32 %v2450
        %vm2558 = vweird.f32 %v2552
        %vm2559 = vmor %vm2557, %vm2558
        %v2560 = vsel %vm2559, %v2552, %v2556
        %v2561 = vand.u32 2147483647, %v2450
        %vm2562 = vcmp.eq.f32.partialorder %v2561, 8.507059e+37
        %v2563 = vand.u32 %v2450, 2147483648
        %v2564 = vor.u32 1.1754944e-38, %v2563
        %v2565 = vsel %vm2562, %v2564, %v2560
        %v2566 = vmul.f32 1.0, %v2565
        %v2567 = vrcp.pop %v2451
        %v2568 = vmul.f32 %v2451, %v2567
        %v2569 = vsub.f32 1.0, %v2568
        %v2570 = vmul.f32 %v2567, %v2569
        %v2571 = vadd.f32 %v2567, %v2570
        %vm2572 = vweird.f32 %v2451
        %vm2573 = vweird.f32 %v2567
        %vm2574 = vmor %vm2572, %vm2573
        %v2575 = vsel %vm2574, %v2567, %v2571
        %v2576 = vand.u32 2147483647, %v2451
        %vm2577 = vcmp.eq.f32.partialorder %v2576, 8.507059e+37
        %v2578 = vand.u32 %v2451, 2147483648
        %v2579 = vor.u32 1.1754944e-38, %v2578
        %v2580 = vsel %vm2577, %v2579, %v2575
        %v2581 = vmul.f32 1.0, %v2580
        %v2582 = vrcp.pop %v2452
        %v2583 = vmul.f32 %v2452, %v2582
        %v2584 = vsub.f32 1.0, %v2583
        %v2585 = vmul.f32 %v2582, %v2584
        %v2586 = vadd.f32 %v2582, %v2585
        %vm2587 = vweird.f32 %v2452
        %vm2588 = vweird.f32 %v2582
        %vm2589 = vmor %vm2587, %vm2588
        %v2590 = vsel %vm2589, %v2582, %v2586
        %v2591 = vand.u32 2147483647, %v2452
        %vm2592 = vcmp.eq.f32.partialorder %v2591, 8.507059e+37
        %v2593 = vand.u32 %v2452, 2147483648
        %v2594 = vor.u32 1.1754944e-38, %v2593
        %v2595 = vsel %vm2592, %v2594, %v2590
        %v2596 = vmul.f32 1.0, %v2595
        %v2597 = vrcp.pop %v2453
        %v2598 = vmul.f32 %v2453, %v2597
        %v2599 = vsub.f32 1.0, %v2598
        %v2600 = vmul.f32 %v2597, %v2599
        %v2601 = vadd.f32 %v2597, %v2600
        %vm2602 = vweird.f32 %v2453
        %vm2603 = vweird.f32 %v2597
        %vm2604 = vmor %vm2602, %vm2603
        %v2605 = vsel %vm2604, %v2597, %v2601
        %v2606 = vand.u32 2147483647, %v2453
        %vm2607 = vcmp.eq.f32.partialorder %v2606, 8.507059e+37
        %v2608 = vand.u32 %v2453, 2147483648
        %v2609 = vor.u32 1.1754944e-38, %v2608
        %v2610 = vsel %vm2607, %v2609, %v2605
        %v2611 = vmul.f32 1.0, %v2610
        %v2612 = vrcp.pop %v2454
        %v2613 = vmul.f32 %v2454, %v2612
        %v2614 = vsub.f32 1.0, %v2613
        %v2615 = vmul.f32 %v2612, %v2614
        %v2616 = vadd.f32 %v2612, %v2615
        %vm2617 = vweird.f32 %v2454
        %vm2618 = vweird.f32 %v2612
        %vm2619 = vmor %vm2617, %vm2618
        %v2620 = vsel %vm2619, %v2612, %v2616
        %v2621 = vand.u32 2147483647, %v2454
        %vm2622 = vcmp.eq.f32.partialorder %v2621, 8.507059e+37
        %v2623 = vand.u32 %v2454, 2147483648
        %v2624 = vor.u32 1.1754944e-38, %v2623
        %v2625 = vsel %vm2622, %v2624, %v2620
        %v2626 = vmul.f32 1.0, %v2625
        %v2627 = vrcp.pop %v2455
        %v2628 = vmul.f32 %v2455, %v2627
        %v2629 = vsub.f32 1.0, %v2628
        %v2630 = vmul.f32 %v2627, %v2629
        %v2631 = vadd.f32 %v2627, %v2630
        %vm2632 = vweird.f32 %v2455
        %vm2633 = vweird.f32 %v2627
        %vm2634 = vmor %vm2632, %vm2633
        %v2635 = vsel %vm2634, %v2627, %v2631
        %v2636 = vand.u32 2147483647, %v2455
        %vm2637 = vcmp.eq.f32.partialorder %v2636, 8.507059e+37
        %v2638 = vand.u32 %v2455, 2147483648
        %v2639 = vor.u32 1.1754944e-38, %v2638
        %v2640 = vsel %vm2637, %v2639, %v2635
        %v2641 = vmul.f32 1.0, %v2640
        %v2642 = vrcp.pop %v2456
        %v2643 = vmul.f32 %v2456, %v2642
        %v2644 = vsub.f32 1.0, %v2643
        %v2645 = vmul.f32 %v2642, %v2644
        %v2646 = vadd.f32 %v2642, %v2645
        %vm2647 = vweird.f32 %v2456
        %vm2648 = vweird.f32 %v2642
        %vm2649 = vmor %vm2647, %vm2648
        %v2650 = vsel %vm2649, %v2642, %v2646
        %v2651 = vand.u32 2147483647, %v2456
        %vm2652 = vcmp.eq.f32.partialorder %v2651, 8.507059e+37
        %v2653 = vand.u32 %v2456, 2147483648
        %v2654 = vor.u32 1.1754944e-38, %v2653
        %v2655 = vsel %vm2652, %v2654, %v2650
        %v2656 = vmul.f32 1.0, %v2655
        %v2657 = vrcp.pop %v2457
        %v2658 = vmul.f32 %v2457, %v2657
        %v2659 = vsub.f32 1.0, %v2658
        %v2660 = vmul.f32 %v2657, %v2659
        %v2661 = vadd.f32 %v2657, %v2660
        %vm2662 = vweird.f32 %v2457
        %vm2663 = vweird.f32 %v2657
        %vm2664 = vmor %vm2662, %vm2663
        %v2665 = vsel %vm2664, %v2657, %v2661
        %v2666 = vand.u32 2147483647, %v2457
        %vm2667 = vcmp.eq.f32.partialorder %v2666, 8.507059e+37
        %v2668 = vand.u32 %v2457, 2147483648
        %v2669 = vor.u32 1.1754944e-38, %v2668
        %v2670 = vsel %vm2667, %v2669, %v2665
        %v2671 = vmul.f32 1.0, %v2670
        %v2672 = vrcp.pop %v2458
        %v2673 = vmul.f32 %v2458, %v2672
        %v2674 = vsub.f32 1.0, %v2673
        %v2675 = vmul.f32 %v2672, %v2674
        %v2676 = vadd.f32 %v2672, %v2675
        %vm2677 = vweird.f32 %v2458
        %vm2678 = vweird.f32 %v2672
        %vm2679 = vmor %vm2677, %vm2678
        %v2680 = vsel %vm2679, %v2672, %v2676
        %v2681 = vand.u32 2147483647, %v2458
        %vm2682 = vcmp.eq.f32.partialorder %v2681, 8.507059e+37
        %v2683 = vand.u32 %v2458, 2147483648
        %v2684 = vor.u32 1.1754944e-38, %v2683
        %v2685 = vsel %vm2682, %v2684, %v2680
        %v2686 = vmul.f32 1.0, %v2685
        %v2687 = vrcp.pop %v2459
        %v2688 = vmul.f32 %v2459, %v2687
        %v2689 = vsub.f32 1.0, %v2688
        %v2690 = vmul.f32 %v2687, %v2689
        %v2691 = vadd.f32 %v2687, %v2690
        %vm2692 = vweird.f32 %v2459
        %vm2693 = vweird.f32 %v2687
        %vm2694 = vmor %vm2692, %vm2693
        %v2695 = vsel %vm2694, %v2687, %v2691
        %v2696 = vand.u32 2147483647, %v2459
        %vm2697 = vcmp.eq.f32.partialorder %v2696, 8.507059e+37
        %v2698 = vand.u32 %v2459, 2147483648
        %v2699 = vor.u32 1.1754944e-38, %v2698
        %v2700 = vsel %vm2697, %v2699, %v2695
        %v2701 = vmul.f32 1.0, %v2700
        %v2702 = vrcp.pop %v2460
        %v2703 = vmul.f32 %v2460, %v2702
        %v2704 = vsub.f32 1.0, %v2703
        %v2705 = vmul.f32 %v2702, %v2704
        %v2706 = vadd.f32 %v2702, %v2705
        %vm2707 = vweird.f32 %v2460
        %vm2708 = vweird.f32 %v2702
        %vm2709 = vmor %vm2707, %vm2708
        %v2710 = vsel %vm2709, %v2702, %v2706
        %v2711 = vand.u32 2147483647, %v2460
        %vm2712 = vcmp.eq.f32.partialorder %v2711, 8.507059e+37
        %v2713 = vand.u32 %v2460, 2147483648
        %v2714 = vor.u32 1.1754944e-38, %v2713
        %v2715 = vsel %vm2712, %v2714, %v2710
        %v2716 = vmul.f32 1.0, %v2715
        %v2717 = vrcp.pop %v2461
        %v2718 = vmul.f32 %v2461, %v2717
        %v2719 = vsub.f32 1.0, %v2718
        %v2720 = vmul.f32 %v2717, %v2719
        %v2721 = vadd.f32 %v2717, %v2720
        %vm2722 = vweird.f32 %v2461
        %vm2723 = vweird.f32 %v2717
        %vm2724 = vmor %vm2722, %vm2723
        %v2725 = vsel %vm2724, %v2717, %v2721
        %v2726 = vand.u32 2147483647, %v2461
        %vm2727 = vcmp.eq.f32.partialorder %v2726, 8.507059e+37
        %v2728 = vand.u32 %v2461, 2147483648
        %v2729 = vor.u32 1.1754944e-38, %v2728
        %v2730 = vsel %vm2727, %v2729, %v2725
        %v2731 = vmul.f32 1.0, %v2730
        %v2732 = vrcp.pop %v2462
        %v2733 = vmul.f32 %v2462, %v2732
        %v2734 = vsub.f32 1.0, %v2733
        %v2735 = vmul.f32 %v2732, %v2734
        %v2736 = vadd.f32 %v2732, %v2735
        %vm2737 = vweird.f32 %v2462
        %vm2738 = vweird.f32 %v2732
        %vm2739 = vmor %vm2737, %vm2738
        %v2740 = vsel %vm2739, %v2732, %v2736
        %v2741 = vand.u32 2147483647, %v2462
        %vm2742 = vcmp.eq.f32.partialorder %v2741, 8.507059e+37
        %v2743 = vand.u32 %v2462, 2147483648
        %v2744 = vor.u32 1.1754944e-38, %v2743
        %v2745 = vsel %vm2742, %v2744, %v2740
        %v2746 = vmul.f32 1.0, %v2745
        %v2747 = vrcp.pop %v2463
        %v2748 = vmul.f32 %v2463, %v2747
        %v2749 = vsub.f32 1.0, %v2748
        %v2750 = vmul.f32 %v2747, %v2749
        %v2751 = vadd.f32 %v2747, %v2750
        %vm2752 = vweird.f32 %v2463
        %vm2753 = vweird.f32 %v2747
        %vm2754 = vmor %vm2752, %vm2753
        %v2755 = vsel %vm2754, %v2747, %v2751
        %v2756 = vand.u32 2147483647, %v2463
        %vm2757 = vcmp.eq.f32.partialorder %v2756, 8.507059e+37
        %v2758 = vand.u32 %v2463, 2147483648
        %v2759 = vor.u32 1.1754944e-38, %v2758
        %v2760 = vsel %vm2757, %v2759, %v2755
        %v2761 = vmul.f32 1.0, %v2760
        %v2762 = vrcp.pop %v2464
        %v2763 = vmul.f32 %v2464, %v2762
        %v2764 = vsub.f32 1.0, %v2763
        %v2765 = vmul.f32 %v2762, %v2764
        %v2766 = vadd.f32 %v2762, %v2765
        %vm2767 = vweird.f32 %v2464
        %vm2768 = vweird.f32 %v2762
        %vm2769 = vmor %vm2767, %vm2768
        %v2770 = vsel %vm2769, %v2762, %v2766
        %v2771 = vand.u32 2147483647, %v2464
        %vm2772 = vcmp.eq.f32.partialorder %v2771, 8.507059e+37
        %v2773 = vand.u32 %v2464, 2147483648
        %v2774 = vor.u32 1.1754944e-38, %v2773
        %v2775 = vsel %vm2772, %v2774, %v2770
        %v2776 = vmul.f32 1.0, %v2775
        %v2777 = vrcp.pop %v2465
        %v2778 = vmul.f32 %v2465, %v2777
        %v2779 = vsub.f32 1.0, %v2778
        %v2780 = vmul.f32 %v2777, %v2779
        %v2781 = vadd.f32 %v2777, %v2780
        %vm2782 = vweird.f32 %v2465
        %vm2783 = vweird.f32 %v2777
        %vm2784 = vmor %vm2782, %vm2783
        %v2785 = vsel %vm2784, %v2777, %v2781
        %v2786 = vand.u32 2147483647, %v2465
        %vm2787 = vcmp.eq.f32.partialorder %v2786, 8.507059e+37
        %v2788 = vand.u32 %v2465, 2147483648
        %v2789 = vor.u32 1.1754944e-38, %v2788
        %v2790 = vsel %vm2787, %v2789, %v2785
        %v2791 = vmul.f32 1.0, %v2790
        %v2792 = vrcp.pop %v2466
        %v2793 = vmul.f32 %v2466, %v2792
        %v2794 = vsub.f32 1.0, %v2793
        %v2795 = vmul.f32 %v2792, %v2794
        %v2796 = vadd.f32 %v2792, %v2795
        %vm2797 = vweird.f32 %v2466
        %vm2798 = vweird.f32 %v2792
        %vm2799 = vmor %vm2797, %vm2798
        %v2800 = vsel %vm2799, %v2792, %v2796
        %v2801 = vand.u32 2147483647, %v2466
        %vm2802 = vcmp.eq.f32.partialorder %v2801, 8.507059e+37
        %v2803 = vand.u32 %v2466, 2147483648
        %v2804 = vor.u32 1.1754944e-38, %v2803
        %v2805 = vsel %vm2802, %v2804, %v2800
        %v2806 = vmul.f32 1.0, %v2805
        %v2807 = vrcp.pop %v2467
        %v2808 = vmul.f32 %v2467, %v2807
        %v2809 = vsub.f32 1.0, %v2808
        %v2810 = vmul.f32 %v2807, %v2809
        %v2811 = vadd.f32 %v2807, %v2810
        %vm2812 = vweird.f32 %v2467
        %vm2813 = vweird.f32 %v2807
        %vm2814 = vmor %vm2812, %vm2813
        %v2815 = vsel %vm2814, %v2807, %v2811
        %v2816 = vand.u32 2147483647, %v2467
        %vm2817 = vcmp.eq.f32.partialorder %v2816, 8.507059e+37
        %v2818 = vand.u32 %v2467, 2147483648
        %v2819 = vor.u32 1.1754944e-38, %v2818
        %v2820 = vsel %vm2817, %v2819, %v2815
        %v2821 = vmul.f32 1.0, %v2820
        %v2822 = vrcp.pop %v2468
        %v2823 = vmul.f32 %v2468, %v2822
        %v2824 = vsub.f32 1.0, %v2823
        %v2825 = vmul.f32 %v2822, %v2824
        %v2826 = vadd.f32 %v2822, %v2825
        %vm2827 = vweird.f32 %v2468
        %vm2828 = vweird.f32 %v2822
        %vm2829 = vmor %vm2827, %vm2828
        %v2830 = vsel %vm2829, %v2822, %v2826
        %v2831 = vand.u32 2147483647, %v2468
        %vm2832 = vcmp.eq.f32.partialorder %v2831, 8.507059e+37
        %v2833 = vand.u32 %v2468, 2147483648
        %v2834 = vor.u32 1.1754944e-38, %v2833
        %v2835 = vsel %vm2832, %v2834, %v2830
        %v2836 = vmul.f32 1.0, %v2835
        %v2837 = vrcp.pop %v2469
        %v2838 = vmul.f32 %v2469, %v2837
        %v2839 = vsub.f32 1.0, %v2838
        %v2840 = vmul.f32 %v2837, %v2839
        %v2841 = vadd.f32 %v2837, %v2840
        %vm2842 = vweird.f32 %v2469
        %vm2843 = vweird.f32 %v2837
        %vm2844 = vmor %vm2842, %vm2843
        %v2845 = vsel %vm2844, %v2837, %v2841
        %v2846 = vand.u32 2147483647, %v2469
        %vm2847 = vcmp.eq.f32.partialorder %v2846, 8.507059e+37
        %v2848 = vand.u32 %v2469, 2147483648
        %v2849 = vor.u32 1.1754944e-38, %v2848
        %v2850 = vsel %vm2847, %v2849, %v2845
        %v2851 = vmul.f32 1.0, %v2850
        %v2852 = vrcp.pop %v2470
        %v2853 = vmul.f32 %v2470, %v2852
        %v2854 = vsub.f32 1.0, %v2853
        %v2855 = vmul.f32 %v2852, %v2854
        %v2856 = vadd.f32 %v2852, %v2855
        %vm2857 = vweird.f32 %v2470
        %vm2858 = vweird.f32 %v2852
        %vm2859 = vmor %vm2857, %vm2858
        %v2860 = vsel %vm2859, %v2852, %v2856
        %v2861 = vand.u32 2147483647, %v2470
        %vm2862 = vcmp.eq.f32.partialorder %v2861, 8.507059e+37
        %v2863 = vand.u32 %v2470, 2147483648
        %v2864 = vor.u32 1.1754944e-38, %v2863
        %v2865 = vsel %vm2862, %v2864, %v2860
        %v2866 = vmul.f32 1.0, %v2865
        %v2867 = vrcp.pop %v2471
        %v2868 = vmul.f32 %v2471, %v2867
        %v2869 = vsub.f32 1.0, %v2868
        %v2870 = vmul.f32 %v2867, %v2869
        %v2871 = vadd.f32 %v2867, %v2870
        %vm2872 = vweird.f32 %v2471
        %vm2873 = vweird.f32 %v2867
        %vm2874 = vmor %vm2872, %vm2873
        %v2875 = vsel %vm2874, %v2867, %v2871
        %v2876 = vand.u32 2147483647, %v2471
        %vm2877 = vcmp.eq.f32.partialorder %v2876, 8.507059e+37
        %v2878 = vand.u32 %v2471, 2147483648
        %v2879 = vor.u32 1.1754944e-38, %v2878
        %v2880 = vsel %vm2877, %v2879, %v2875
        %v2881 = vmul.f32 1.0, %v2880
        %v2882 = vrcp.pop %v2472
        %v2883 = vmul.f32 %v2472, %v2882
        %v2884 = vsub.f32 1.0, %v2883
        %v2885 = vmul.f32 %v2882, %v2884
        %v2886 = vadd.f32 %v2882, %v2885
        %vm2887 = vweird.f32 %v2472
        %vm2888 = vweird.f32 %v2882
        %vm2889 = vmor %vm2887, %vm2888
        %v2890 = vsel %vm2889, %v2882, %v2886
        %v2891 = vand.u32 2147483647, %v2472
        %vm2892 = vcmp.eq.f32.partialorder %v2891, 8.507059e+37
        %v2893 = vand.u32 %v2472, 2147483648
        %v2894 = vor.u32 1.1754944e-38, %v2893
        %v2895 = vsel %vm2892, %v2894, %v2890
        %v2896 = vmul.f32 1.0, %v2895
        %v2897 = vrcp.pop %v2473
        %v2898 = vmul.f32 %v2473, %v2897
        %v2899 = vsub.f32 1.0, %v2898
        %v2900 = vmul.f32 %v2897, %v2899
        %v2901 = vadd.f32 %v2897, %v2900
        %vm2902 = vweird.f32 %v2473
        %vm2903 = vweird.f32 %v2897
        %vm2904 = vmor %vm2902, %vm2903
        %v2905 = vsel %vm2904, %v2897, %v2901
        %v2906 = vand.u32 2147483647, %v2473
        %vm2907 = vcmp.eq.f32.partialorder %v2906, 8.507059e+37
        %v2908 = vand.u32 %v2473, 2147483648
        %v2909 = vor.u32 1.1754944e-38, %v2908
        %v2910 = vsel %vm2907, %v2909, %v2905
        %v2911 = vmul.f32 1.0, %v2910
        %v2912 = vrcp.pop %v2474
        %v2913 = vmul.f32 %v2474, %v2912
        %v2914 = vsub.f32 1.0, %v2913
        %v2915 = vmul.f32 %v2912, %v2914
        %v2916 = vadd.f32 %v2912, %v2915
        %vm2917 = vweird.f32 %v2474
        %vm2918 = vweird.f32 %v2912
        %vm2919 = vmor %vm2917, %vm2918
        %v2920 = vsel %vm2919, %v2912, %v2916
        %v2921 = vand.u32 2147483647, %v2474
        %vm2922 = vcmp.eq.f32.partialorder %v2921, 8.507059e+37
        %v2923 = vand.u32 %v2474, 2147483648
        %v2924 = vor.u32 1.1754944e-38, %v2923
        %v2925 = vsel %vm2922, %v2924, %v2920
        %v2926 = vmul.f32 1.0, %v2925
        %v2927 = vrcp.pop %v2475
        %v2928 = vmul.f32 %v2475, %v2927
        %v2929 = vsub.f32 1.0, %v2928
        %v2930 = vmul.f32 %v2927, %v2929
        %v2931 = vadd.f32 %v2927, %v2930
        %vm2932 = vweird.f32 %v2475
        %vm2933 = vweird.f32 %v2927
        %vm2934 = vmor %vm2932, %vm2933
        %v2935 = vsel %vm2934, %v2927, %v2931
        %v2936 = vand.u32 2147483647, %v2475
        %vm2937 = vcmp.eq.f32.partialorder %v2936, 8.507059e+37
        %v2938 = vand.u32 %v2475, 2147483648
        %v2939 = vor.u32 1.1754944e-38, %v2938
        %v2940 = vsel %vm2937, %v2939, %v2935
        %v2941 = vmul.f32 1.0, %v2940
        %v2942 = vrcp.pop %v2476
        %v2943 = vmul.f32 %v2476, %v2942
        %v2944 = vsub.f32 1.0, %v2943
        %v2945 = vmul.f32 %v2942, %v2944
        %v2946 = vadd.f32 %v2942, %v2945
        %vm2947 = vweird.f32 %v2476
        %vm2948 = vweird.f32 %v2942
        %vm2949 = vmor %vm2947, %vm2948
        %v2950 = vsel %vm2949, %v2942, %v2946
        %v2951 = vand.u32 2147483647, %v2476
        %vm2952 = vcmp.eq.f32.partialorder %v2951, 8.507059e+37
        %v2953 = vand.u32 %v2476, 2147483648
        %v2954 = vor.u32 1.1754944e-38, %v2953
        %v2955 = vsel %vm2952, %v2954, %v2950
        %v2956 = vmul.f32 1.0, %v2955
        %v2957 = vmul.f32 %v2270, %v2491
        %v2958 = vmul.f32 %v2272, %v2506
        %v2959 = vmul.f32 %v2275, %v2521
        %v2960 = vmul.f32 %v2277, %v2536
        %v2961 = vmul.f32 %v2280, %v2551
        %v2962 = vmul.f32 %v2282, %v2566
        %v2963 = vmul.f32 %v2285, %v2581
        %v2964 = vmul.f32 %v2287, %v2596
        %v2965 = vmul.f32 %v2290, %v2611
        %v2966 = vmul.f32 %v2292, %v2626
        %v2967 = vmul.f32 %v2295, %v2641
        %v2968 = vmul.f32 %v2297, %v2656
        %v2969 = vmul.f32 %v2300, %v2671
        %v2970 = vmul.f32 %v2302, %v2686
        %v2971 = vmul.f32 %v2305, %v2701
        %v2972 = vmul.f32 %v2307, %v2716
        %v2973 = vmul.f32 %v2310, %v2731
        %v2974 = vmul.f32 %v2312, %v2746
        %v2975 = vmul.f32 %v2315, %v2761
        %v2976 = vmul.f32 %v2317, %v2776
        %v2977 = vmul.f32 %v2320, %v2791
        %v2978 = vmul.f32 %v2322, %v2806
        %v2979 = vmul.f32 %v2325, %v2821
        %v2980 = vmul.f32 %v2327, %v2836
        %v2981 = vmul.f32 %v2330, %v2851
        %v2982 = vmul.f32 %v2332, %v2866
        %v2983 = vmul.f32 %v2335, %v2881
        %v2984 = vmul.f32 %v2337, %v2896
        %v2985 = vmul.f32 %v2340, %v2911
        %v2986 = vmul.f32 %v2342, %v2926
        %v2987 = vmul.f32 %v2345, %v2941
        %v2988 = vmul.f32 %v2347, %v2956
        %2989 = vst [vmem:[%s210] sm:$0xff] %v2957
        %2990 = vst [vmem:[%s210 + $0x8] sm:$0xff] %v2958
        %2991 = vst [vmem:[%s210 + $0x10] sm:$0xff] %v2959
        %2992 = vst [vmem:[%s210 + $0x18] sm:$0xff] %v2960
        %2993 = vst [vmem:[%s210 + $0x20] sm:$0xff] %v2961
        %2994 = vst [vmem:[%s210 + $0x28] sm:$0xff] %v2962
        %2995 = vst [vmem:[%s210 + $0x30] sm:$0xff] %v2963
        %2996 = vst [vmem:[%s210 + $0x38] sm:$0xff] %v2964
        %2997 = vst [vmem:[%s210 + $0x40] sm:$0xff] %v2965
        %2998 = vst [vmem:[%s210 + $0x48] sm:$0xff] %v2966
        %2999 = vst [vmem:[%s210 + $0x50] sm:$0xff] %v2967
        %3000 = vst [vmem:[%s210 + $0x58] sm:$0xff] %v2968
        %3001 = vst [vmem:[%s210 + $0x60] sm:$0xff] %v2969
        %3002 = vst [vmem:[%s210 + $0x68] sm:$0xff] %v2970
        %3003 = vst [vmem:[%s210 + $0x70] sm:$0xff] %v2971
        %3004 = vst [vmem:[%s210 + $0x78] sm:$0xff] %v2972
        %3005 = vst [vmem:[%s210 + $0x80] sm:$0xff] %v2973
        %3006 = vst [vmem:[%s210 + $0x88] sm:$0xff] %v2974
        %3007 = vst [vmem:[%s210 + $0x90] sm:$0xff] %v2975
        %3008 = vst [vmem:[%s210 + $0x98] sm:$0xff] %v2976
        %3009 = vst [vmem:[%s210 + $0xa0] sm:$0xff] %v2977
        %3010 = vst [vmem:[%s210 + $0xa8] sm:$0xff] %v2978
        %3011 = vst [vmem:[%s210 + $0xb0] sm:$0xff] %v2979
        %3012 = vst [vmem:[%s210 + $0xb8] sm:$0xff] %v2980
        %3013 = vst [vmem:[%s210 + $0xc0] sm:$0xff] %v2981
        %3014 = vst [vmem:[%s210 + $0xc8] sm:$0xff] %v2982
        %3015 = vst [vmem:[%s210 + $0xd0] sm:$0xff] %v2983
        %3016 = vst [vmem:[%s210 + $0xd8] sm:$0xff] %v2984
        %3017 = vst [vmem:[%s210 + $0xe0] sm:$0xff] %v2985
        %3018 = vst [vmem:[%s210 + $0xe8] sm:$0xff] %v2986
        %3019 = vst [vmem:[%s210 + $0xf0] sm:$0xff] %v2987
        %3020 = vst [vmem:[%s210 + $0xf8] sm:$0xff] %v2988
        %s3021 = sand.u32 %s126, 1
        %s3022 = scalar_lea.sflag [#allocation3], %s3021
        %s3023 = sand.u32 %s126, 1
        %s3024 = smul.addr %s3023, 256
        %s3025 = scalar_lea.vmem [#allocation2], %s3024
        // Predicated region
        $region33: #{tpu_custom_call.1} parent=31 // pred_check
          %p3026 = pneg %p136
        $region34: #{tpu_custom_call.1} parent=31 // pred_check_branch
          %3028 = sbr.rel (%p3026) target = $region36
        $region35: #{tpu_custom_call.1} parent=31 // pred_region
          %s3029 = smul.u32 16, %s24
          %3031 = vsyncadd %s3022, 0
          %s3032 = smul.addr %s3029, 2
          %s3033 = sadd.s32 %s23, %s3032
          %s3034 = smul.addr %s22, 32
          %s3035 = sadd.s32 %s3033, %s3034
          %s3036 = smul.addr %s3035, 8
          %s3037 = scalar_lea.hbm %s3, %s3036
          %s3038 = sshll.u32 %s3025, 4
          %s3039 = int_to_ptr.vmem [resolvable:$true] %s3038
          %s3040 = sshll.u32 %s3037, 4
          %s3041 = int_to_ptr.hbm [resolvable:$true] %s3040
          %3046 = dma.vmem_to_hbm [thread:$0]  %s3039, 4096, %s3041, %s3022, 128, 128, 8
        $region36: #{tpu_custom_call.1} parent=31 // pred_fallthru
          _
      $region32: #{tpu_custom_call.1} parent=5 // pred_fallthru
        _
      %p3047 = scmp.le.s32.totalorder 2, %s12
      // Predicated region
      $region37: #{tpu_custom_call.1} parent=5 // pred_check
        %p3048 = pneg %p3047
      $region38: #{tpu_custom_call.1} parent=5 // pred_check_branch
        %3050 = sbr.rel (%p3048) target = $region40
      $region39: #{tpu_custom_call.1} parent=5 // pred_region
        %s3051 = ssub.s32 %s12, 2
        // Predicated region
        $region41: #{tpu_custom_call.1} parent=39 // pred_check
          %p3052 = pneg %p142
        $region42: #{tpu_custom_call.1} parent=39 // pred_check_branch
          %3054 = sbr.rel (%p3052) target = $region44
        $region43: #{tpu_custom_call.1} parent=39 // pred_region
          %s3055 = sand.u32 %s127, 1
          %s3056 = scalar_lea.sflag [#allocation3], %s3055
          %s3057 = sand.u32 %s127, 1
          %s3058 = smul.addr %s3057, 256
          %s3059 = scalar_lea.vmem [#allocation2], %s3058
          %3061 = dma.done %s3056, 4096
        $region44: #{tpu_custom_call.1} parent=39 // pred_fallthru
          _
      $region40: #{tpu_custom_call.1} parent=5 // pred_fallthru
        _
    $region6: #{tpu_custom_call.1} parent=1 // loop_footer
      %s16 = sadd.s32 1, %s12
    $region7: #{tpu_custom_call.1} parent=1 // loop_footer_branch
      %11 = sbr.rel target = $region3
    $region8: #{tpu_custom_call.1} parent=1 // loop_exit
      _
    %3062 = vsyncpa [#allocation3], 1
    %s3063 = scalar_lea.sflag [#allocation3], 1
    %3064 = vsyncpa %s3063, 1

</llo_original>
